<compile_context>
chip_gen: v7x
topology: tpu7x:2x2x1
jax: 0.10.0
libtpu: 0.0.40
codegen_flags: <defaults>
</compile_context>

<pallas_src>
import jax
import jax.numpy as jnp
from jax import lax
from jax.experimental import pallas as pl
from jax.experimental.pallas import tpu as pltpu

LN_EPS = 1e-5
DPAD = 128        # feature dim padded to a full lane width
OUT_PAD = 128     # head output padded to a full lane width -> unmasked vst
NODE_ALIGN = 128  # node count padded to a lane-width multiple


# ---------------------------------------------------------------------------
# Fused Pallas kernel
# ---------------------------------------------------------------------------
def make_fused_kernel(num_gnn_layers, num_linear_layers, d_real):
    inv_d = float(1.0 / d_real)

    def kernel(a_ref, x0_ref, sel_ref,
               gw_ref, gb_ref, gg_ref, gbe_ref,
               lw_ref, lb_ref, lg_ref, lbe_ref,
               wo_ref, bo_ref, o_ref):
        dpad = x0_ref.shape[-1]
        # Padded lanes of h are exactly 0 (zero-padded weights/bias), but they
        # must not enter the LayerNorm variance: mask the centered values and
        # normalize by the real feature count.
        lane_mask = (lax.broadcasted_iota(jnp.int32, (1, dpad), 1)
                     < d_real).astype(jnp.float32)

        def layernorm_relu(h, gamma, beta):
            mu = jnp.sum(h, axis=-1, keepdims=True) * inv_d
            diff = (h - mu) * lane_mask
            var = jnp.sum(diff * diff, axis=-1, keepdims=True) * inv_d
            hn = diff * lax.rsqrt(var + LN_EPS)
            return jnp.maximum(hn * gamma + beta, 0.0)   # activation = ReLU

        a = a_ref[...]                      # [Np, Np] bf16 normalized adjacency
        x = x0_ref[...]                     # [Np, Dp] bf16 embedded features

        # ---- GCN stack: (A_norm @ (X @ W) + b) -> LayerNorm -> ReLU ----------
        # Layer count is static -> Python loop fully unrolls; x stays in VMEM.
        for l in range(num_gnn_layers):
            xw = jnp.dot(x, gw_ref[l], preferred_element_type=jnp.float32)
            h = jnp.dot(a, xw.astype(jnp.bfloat16),
                        preferred_element_type=jnp.float32) + gb_ref[l]
            x = layernorm_relu(h, gg_ref[l], gbe_ref[l]).astype(jnp.bfloat16)
        # TODO(synk): training-time Dropout not implemented (p=0 / eval mode).

        # ---- target index_select: exact one-hot selector (built in wrapper) --
        t = jnp.dot(sel_ref[...], x,
                    preferred_element_type=jnp.float32).astype(jnp.bfloat16)

        # ---- Linear stack: Linear -> LayerNorm -> ReLU -----------------------
        for l in range(num_linear_layers):
            h = jnp.dot(t, lw_ref[l],
                        preferred_element_type=jnp.float32) + lb_ref[l]
            t = layernorm_relu(h, lg_ref[l], lbe_ref[l]).astype(jnp.bfloat16)

        # ---- output head: lane-dense padded store ([T, 128]) -----------------
        o_ref[...] = (jnp.dot(t, wo_ref[...],
                              preferred_element_type=jnp.float32) + bo_ref[...])

    return kernel


def gnn_forward_fused(a_norm, x0, sel, gnn_w, gnn_b, gnn_g, gnn_be,
                      lin_w, lin_b, lin_g, lin_be, w_out, b_out,
                      d_real, out_size):
    t = sel.shape[0]
    lg = gnn_w.shape[0]
    ll = lin_w.shape[0]
    operands = (a_norm, x0, sel, gnn_w, gnn_b, gnn_g, gnn_be,
                lin_w, lin_b, lin_g, lin_be, w_out, b_out)

    # Single invocation (no grid): whole arrays live in VMEM exactly once (no
    # double-buffering).  Set the scoped-VMEM limit explicitly as a guard.
    # TODO(synk): for graphs beyond a few thousand nodes, stream row-blocks of
    # A over a "parallel" grid axis (keeps XW resident, re-enables pipelining
    # and lets v7x split rows across its 2 TensorCores) instead of keeping the
    # dense adjacency fully VMEM-resident.
    vmem_bytes = sum(int(o.size) * o.dtype.itemsize for o in operands)
    vmem_bytes += t * OUT_PAD * 4
    vmem_limit = int(max(2 * vmem_bytes + (4 << 20), 16 << 20))

    vmem_spec = pl.BlockSpec(memory_space=pltpu.MemorySpace.VMEM)
    out = pl.pallas_call(
        make_fused_kernel(lg, ll, d_real),
        out_shape=jax.ShapeDtypeStruct((t, OUT_PAD), jnp.float32),
        in_specs=[vmem_spec] * len(operands),
        out_specs=vmem_spec,
        compiler_params=pltpu.CompilerParams(vmem_limit_bytes=vmem_limit),
    )(*operands)
    return out[:, :out_size]


# ---------------------------------------------------------------------------
# Plain-JAX glue
# ---------------------------------------------------------------------------
def _round_up(x, m):
    return (x + m - 1) // m * m


def _pad2(a, rows, cols):
    """Zero-pad the last two dims of `a` to (rows, cols)."""
    pads = [(0, 0)] * (a.ndim - 2) + [(0, rows - a.shape[-2]),
                                      (0, cols - a.shape[-1])]
    return jnp.pad(a, pads)


def build_gcn_adjacency(edge_index, num_nodes, num_nodes_pad):
    """Dense D^{-1/2}(A+I)D^{-1/2}, degrees via segment-sum over edges, bf16 output."""
    src, dst = edge_index[0], edge_index[1]
    deg = jnp.zeros((num_nodes,), jnp.float32).at[dst].add(1.0) + 1.0
    dinv = lax.rsqrt(deg)
    dinv = jnp.pad(dinv, (0, num_nodes_pad - num_nodes))   # padded nodes -> 0
    a = jnp.zeros((num_nodes_pad, num_nodes_pad), jnp.float32)
    a = a.at[dst, src].add(1.0)
    diag = jnp.arange(num_nodes)
    a = a.at[diag, diag].add(1.0)
    # TODO(synk): for large graphs, replace dense A @ X with a sparse segment-sum SpMM.
    return (a * dinv[:, None] * dinv[None, :]).astype(jnp.bfloat16)


def init_params(key, vocab_size, emb_size, num_gnn_layers, num_linear_layers, out_size):
    """Deterministic synthetic parameters at real (unpadded) sizes (feature_size == 1)."""
    ks = jax.random.split(key, 11)
    p = {}
    p["embedding"] = jax.random.normal(ks[0], (vocab_size, emb_size)) * 0.1
    p["gnn_w"] = jax.random.normal(ks[1], (num_gnn_layers, emb_size, emb_size)) * 0.1
    p["gnn_b"] = jax.random.normal(ks[2], (num_gnn_layers, 1, emb_size)) * 0.01
    p["gnn_g"] = 1.0 + jax.random.normal(ks[3], (num_gnn_layers, 1, emb_size)) * 0.01
    p["gnn_be"] = jax.random.normal(ks[4], (num_gnn_layers, 1, emb_size)) * 0.01
    p["lin_w"] = jax.random.normal(ks[5], (num_linear_layers, emb_size, emb_size)) * 0.1
    p["lin_b"] = jax.random.normal(ks[6], (num_linear_layers, 1, emb_size)) * 0.01
    p["lin_g"] = 1.0 + jax.random.normal(ks[7], (num_linear_layers, 1, emb_size)) * 0.01
    p["lin_be"] = jax.random.normal(ks[8], (num_linear_layers, 1, emb_size)) * 0.01
    p["w_out"] = jax.random.normal(ks[9], (emb_size, out_size)) * 0.1
    p["b_out"] = jax.random.normal(ks[10], (1, out_size)) * 0.01
    return {k: v.astype(jnp.float32) for k, v in p.items()}


def gnn_classification_forward(params, x_ids, edge_index, target_indices):
    """Inference-mode forward (dropout p=0, self.training == False)."""
    # feature_size == 1 branch: ravel ids -> embedding lookup (XLA gather glue)
    x = jnp.take(params["embedding"].astype(jnp.float32),
                 jnp.ravel(x_ids), axis=0)                       # [N, D]
    n, d = x.shape
    npad = _round_up(n, NODE_ALIGN)
    tgt = jnp.ravel(target_indices).astype(jnp.int32)
    t = tgt.shape[0]
    out_size = params["w_out"].shape[1]

    # 'binaryEdge' edge list -> dense normalized adjacency (XLA glue), bf16
    a_norm = build_gcn_adjacency(edge_index, n, npad)                       # [Np,Np]
    x0 = _pad2(x, npad, DPAD).astype(jnp.bfloat16)                          # [Np,Dp]
    sel = (lax.broadcasted_iota(jnp.int32, (t, npad), 1)
           == tgt[:, None]).astype(jnp.bfloat16)                           # [T,Np]

    gnn_w = _pad2(params["gnn_w"], DPAD, DPAD).astype(jnp.bfloat16)         # [Lg,Dp,Dp]
    lin_w = _pad2(params["lin_w"], DPAD, DPAD).astype(jnp.bfloat16)         # [Ll,Dp,Dp]
    gnn_b = _pad2(params["gnn_b"], 1, DPAD)                                 # f32, pad = 0
    gnn_g = _pad2(params["gnn_g"], 1, DPAD)
    gnn_be = _pad2(params["gnn_be"], 1, DPAD)
    lin_b = _pad2(params["lin_b"], 1, DPAD)
    lin_g = _pad2(params["lin_g"], 1, DPAD)
    lin_be = _pad2(params["lin_be"], 1, DPAD)
    w_out = _pad2(params["w_out"], DPAD, OUT_PAD).astype(jnp.bfloat16)      # [Dp,128]
    b_out = _pad2(params["b_out"], 1, OUT_PAD)                              # [1,128]

    return gnn_forward_fused(a_norm, x0, sel, gnn_w, gnn_b, gnn_g, gnn_be,
                             lin_w, lin_b, lin_g, lin_be, w_out, b_out,
                             d_real=d, out_size=out_size)       # [T, out_size]


# ---------------------------------------------------------------------------
# Pure-JAX reference at real (unpadded) sizes, bf16-matched matmuls
# ---------------------------------------------------------------------------
def reference_forward(params, x_ids, edge_index, target_indices):
    def bdot(a, b):
        return jnp.dot(a.astype(jnp.bfloat16), b.astype(jnp.bfloat16),
                       preferred_element_type=jnp.float32)

    def ln_relu(h, g, b):
        mu = jnp.mean(h, axis=-1, keepdims=True)
        var = jnp.mean((h - mu) ** 2, axis=-1, keepdims=True)
        return jnp.maximum((h - mu) * lax.rsqrt(var + LN_EPS) * g + b, 0.0)

    x = jnp.take(params["embedding"].astype(jnp.float32), jnp.ravel(x_ids), axis=0)
    n = x.shape[0]
    src, dst = edge_index[0], edge_index[1]
    a = jnp.zeros((n, n), jnp.float32).at[dst, src].add(1.0)
    a = a + jnp.eye(n, dtype=jnp.float32)
    deg = jnp.sum(a, axis=1)
    dinv = lax.rsqrt(deg)
    a = a * dinv[:, None] * dinv[None, :]

    for l in range(params["gnn_w"].shape[0]):
        h = bdot(a, bdot(x, params["gnn_w"][l])) + params["gnn_b"][l]
        x = ln_relu(h, params["gnn_g"][l], params["gnn_be"][l])
    x = jnp.take(x, jnp.ravel(target_indices), axis=0)
    for l in range(params["lin_w"].shape[0]):
        h = bdot(x, params["lin_w"][l]) + params["lin_b"][l]
        x = ln_relu(h, params["lin_g"][l], params["lin_be"][l])
    return bdot(x, params["w_out"]) + params["b_out"]


if __name__ == "__main__":
    # small, deterministic synthetic problem
    NUM_NODES = 64
    NUM_EDGES = 128
    NUM_TARGETS = 8
    VOCAB_SIZE = 16
    EMB_SIZE = 32
    NUM_GNN_LAYERS = 2
    NUM_LINEAR_LAYERS = 2
    LABEL_SIZE = 2  # -> output_size = 1

    key = jax.random.PRNGKey(0)
    k_par, k_ids, k_src, k_dst, k_tgt = jax.random.split(key, 5)

    params = init_params(
        k_par, VOCAB_SIZE, EMB_SIZE, NUM_GNN_LAYERS, NUM_LINEAR_LAYERS, out_size=1
    )

    x_ids = jax.random.randint(k_ids, (NUM_NODES, 1), 0, VOCAB_SIZE, dtype=jnp.int32)
    edge_index = jnp.stack(
        [
            jax.random.randint(k_src, (NUM_EDGES,), 0, NUM_NODES, dtype=jnp.int32),
            jax.random.randint(k_dst, (NUM_EDGES,), 0, NUM_NODES, dtype=jnp.int32),
        ],
        axis=0,
    )  # 'binaryEdge' edge list, shape [2, E]
    target_indices = jax.random.randint(
        k_tgt, (NUM_TARGETS, 1), 0, NUM_NODES, dtype=jnp.int32
    )

    out = gnn_classification_forward(params, x_ids, edge_index, target_indices)
    out = jax.block_until_ready(out)

    ref = reference_forward(params, x_ids, edge_index, target_indices)
    assert out.shape == (NUM_TARGETS, 1)
    assert jnp.allclose(out, ref, atol=2e-3, rtol=2e-3), (
        float(jnp.max(jnp.abs(out - ref))))

    print("KERNEL_OK")
</pallas_src>

<mosaic_0001>
module attributes {stable_mosaic.version = 11 : i64} {
  func.func @kernel(%arg0: memref<128x128xbf16, #tpu.memory_space<vmem>>, %arg1: memref<128x128xbf16, #tpu.memory_space<vmem>>, %arg2: memref<8x128xbf16, #tpu.memory_space<vmem>>, %arg3: memref<2x128x128xbf16, #tpu.memory_space<vmem>>, %arg4: memref<2x1x128xf32, #tpu.memory_space<vmem>>, %arg5: memref<2x1x128xf32, #tpu.memory_space<vmem>>, %arg6: memref<2x1x128xf32, #tpu.memory_space<vmem>>, %arg7: memref<2x128x128xbf16, #tpu.memory_space<vmem>>, %arg8: memref<2x1x128xf32, #tpu.memory_space<vmem>>, %arg9: memref<2x1x128xf32, #tpu.memory_space<vmem>>, %arg10: memref<2x1x128xf32, #tpu.memory_space<vmem>>, %arg11: memref<128x128xbf16, #tpu.memory_space<vmem>>, %arg12: memref<1x128xf32, #tpu.memory_space<vmem>>, %arg13: memref<8x128xf32, #tpu.memory_space<vmem>>) attributes {dimension_semantics = [], scalar_prefetch = 0 : i64, scratch_operands = 0 : i64, tpu.core_type = #tpu.core_type<tc>} {
    %0 = tpu.iota {dimensions = array<i32: 1>} : vector<1x128xi32>
    %c32_i32 = arith.constant 32 : i32
    %1 = vector.broadcast %c32_i32 : i32 to vector<1x128xi32>
    %2 = arith.cmpi slt, %0, %1 : vector<1x128xi32>
    %3 = arith.extui %2 : vector<1x128xi1> to vector<1x128xi32>
    %4 = arith.sitofp %3 : vector<1x128xi32> to vector<1x128xf32>
    %c0 = arith.constant 0 : index
    %c0_0 = arith.constant 0 : index
    %5 = vector.load %arg0[%c0, %c0_0] : memref<128x128xbf16, #tpu.memory_space<vmem>>, vector<128x128xbf16>
    %c0_1 = arith.constant 0 : index
    %c0_2 = arith.constant 0 : index
    %6 = vector.load %arg1[%c0_1, %c0_2] : memref<128x128xbf16, #tpu.memory_space<vmem>>, vector<128x128xbf16>
    %c0_3 = arith.constant 0 : index
    %c0_4 = arith.constant 0 : index
    %c0_5 = arith.constant 0 : index
    %7 = vector.load %arg3[%c0_3, %c0_4, %c0_5] : memref<2x128x128xbf16, #tpu.memory_space<vmem>>, vector<1x128x128xbf16>
    %8 = vector.shape_cast %7 : vector<1x128x128xbf16> to vector<128x128xbf16>
    %cst = arith.constant dense<0.000000e+00> : vector<128x128xf32>
    %9 = tpu.matmul %6, %8, %cst {dimension_numbers = #tpu.dot_dimension_numbers<[1], [0], [0], [1], [0, 0, 1, 1], [], []>} : vector<128x128xbf16>, vector<128x128xbf16>, vector<128x128xf32> -> vector<128x128xf32>
    %10 = arith.truncf %9 : vector<128x128xf32> to vector<128x128xbf16>
    %cst_6 = arith.constant dense<0.000000e+00> : vector<128x128xf32>
    %11 = tpu.matmul %5, %10, %cst_6 {dimension_numbers = #tpu.dot_dimension_numbers<[1], [0], [0], [1], [0, 0, 1, 1], [], []>} : vector<128x128xbf16>, vector<128x128xbf16>, vector<128x128xf32> -> vector<128x128xf32>
    %c0_7 = arith.constant 0 : index
    %c0_8 = arith.constant 0 : index
    %c0_9 = arith.constant 0 : index
    %12 = vector.load %arg4[%c0_7, %c0_8, %c0_9] : memref<2x1x128xf32, #tpu.memory_space<vmem>>, vector<1x1x128xf32>
    %13 = vector.shape_cast %12 : vector<1x1x128xf32> to vector<1x128xf32>
    %14 = vector.broadcast %13 : vector<1x128xf32> to vector<128x128xf32>
    %15 = arith.addf %11, %14 : vector<128x128xf32>
    %c0_10 = arith.constant 0 : index
    %c0_11 = arith.constant 0 : index
    %c0_12 = arith.constant 0 : index
    %16 = vector.load %arg5[%c0_10, %c0_11, %c0_12] : memref<2x1x128xf32, #tpu.memory_space<vmem>>, vector<1x1x128xf32>
    %17 = vector.shape_cast %16 : vector<1x1x128xf32> to vector<1x128xf32>
    %c0_13 = arith.constant 0 : index
    %c0_14 = arith.constant 0 : index
    %c0_15 = arith.constant 0 : index
    %18 = vector.load %arg6[%c0_13, %c0_14, %c0_15] : memref<2x1x128xf32, #tpu.memory_space<vmem>>, vector<1x1x128xf32>
    %19 = vector.shape_cast %18 : vector<1x1x128xf32> to vector<1x128xf32>
    %cst_16 = arith.constant dense<0.000000e+00> : vector<128xf32>
    %20 = vector.multi_reduction <add>, %15, %cst_16 [1] : vector<128x128xf32> to vector<128xf32>
    %21 = vector.shape_cast %20 : vector<128xf32> to vector<128x1xf32>
    %cst_17 = arith.constant 3.125000e-02 : f32
    %22 = vector.broadcast %cst_17 : f32 to vector<128x1xf32>
    %23 = arith.mulf %21, %22 : vector<128x1xf32>
    %24 = vector.broadcast %23 : vector<128x1xf32> to vector<128x128xf32>
    %25 = arith.subf %15, %24 : vector<128x128xf32>
    %26 = vector.broadcast %4 : vector<1x128xf32> to vector<128x128xf32>
    %27 = arith.mulf %25, %26 : vector<128x128xf32>
    %28 = arith.mulf %27, %27 : vector<128x128xf32>
    %cst_18 = arith.constant dense<0.000000e+00> : vector<128xf32>
    %29 = vector.multi_reduction <add>, %28, %cst_18 [1] : vector<128x128xf32> to vector<128xf32>
    %30 = vector.shape_cast %29 : vector<128xf32> to vector<128x1xf32>
    %cst_19 = arith.constant 3.125000e-02 : f32
    %31 = vector.broadcast %cst_19 : f32 to vector<128x1xf32>
    %32 = arith.mulf %30, %31 : vector<128x1xf32>
    %cst_20 = arith.constant 9.99999974E-6 : f32
    %33 = vector.broadcast %cst_20 : f32 to vector<128x1xf32>
    %34 = arith.addf %32, %33 : vector<128x1xf32>
    %35 = math.rsqrt %34 : vector<128x1xf32>
    %36 = vector.broadcast %35 : vector<128x1xf32> to vector<128x128xf32>
    %37 = arith.mulf %27, %36 : vector<128x128xf32>
    %38 = vector.broadcast %17 : vector<1x128xf32> to vector<128x128xf32>
    %39 = arith.mulf %37, %38 : vector<128x128xf32>
    %40 = vector.broadcast %19 : vector<1x128xf32> to vector<128x128xf32>
    %41 = arith.addf %39, %40 : vector<128x128xf32>
    %cst_21 = arith.constant 0.000000e+00 : f32
    %42 = vector.broadcast %cst_21 : f32 to vector<128x128xf32>
    %43 = arith.maximumf %41, %42 : vector<128x128xf32>
    %44 = arith.truncf %43 : vector<128x128xf32> to vector<128x128xbf16>
    %c1 = arith.constant 1 : index
    %c0_22 = arith.constant 0 : index
    %c0_23 = arith.constant 0 : index
    %45 = vector.load %arg3[%c1, %c0_22, %c0_23] : memref<2x128x128xbf16, #tpu.memory_space<vmem>>, vector<1x128x128xbf16>
    %46 = vector.shape_cast %45 : vector<1x128x128xbf16> to vector<128x128xbf16>
    %cst_24 = arith.constant dense<0.000000e+00> : vector<128x128xf32>
    %47 = tpu.matmul %44, %46, %cst_24 {dimension_numbers = #tpu.dot_dimension_numbers<[1], [0], [0], [1], [0, 0, 1, 1], [], []>} : vector<128x128xbf16>, vector<128x128xbf16>, vector<128x128xf32> -> vector<128x128xf32>
    %48 = arith.truncf %47 : vector<128x128xf32> to vector<128x128xbf16>
    %cst_25 = arith.constant dense<0.000000e+00> : vector<128x128xf32>
    %49 = tpu.matmul %5, %48, %cst_25 {dimension_numbers = #tpu.dot_dimension_numbers<[1], [0], [0], [1], [0, 0, 1, 1], [], []>} : vector<128x128xbf16>, vector<128x128xbf16>, vector<128x128xf32> -> vector<128x128xf32>
    %c1_26 = arith.constant 1 : index
    %c0_27 = arith.constant 0 : index
    %c0_28 = arith.constant 0 : index
    %50 = vector.load %arg4[%c1_26, %c0_27, %c0_28] : memref<2x1x128xf32, #tpu.memory_space<vmem>>, vector<1x1x128xf32>
    %51 = vector.shape_cast %50 : vector<1x1x128xf32> to vector<1x128xf32>
    %52 = vector.broadcast %51 : vector<1x128xf32> to vector<128x128xf32>
    %53 = arith.addf %49, %52 : vector<128x128xf32>
    %c1_29 = arith.constant 1 : index
    %c0_30 = arith.constant 0 : index
    %c0_31 = arith.constant 0 : index
    %54 = vector.load %arg5[%c1_29, %c0_30, %c0_31] : memref<2x1x128xf32, #tpu.memory_space<vmem>>, vector<1x1x128xf32>
    %55 = vector.shape_cast %54 : vector<1x1x128xf32> to vector<1x128xf32>
    %c1_32 = arith.constant 1 : index
    %c0_33 = arith.constant 0 : index
    %c0_34 = arith.constant 0 : index
    %56 = vector.load %arg6[%c1_32, %c0_33, %c0_34] : memref<2x1x128xf32, #tpu.memory_space<vmem>>, vector<1x1x128xf32>
    %57 = vector.shape_cast %56 : vector<1x1x128xf32> to vector<1x128xf32>
    %cst_35 = arith.constant dense<0.000000e+00> : vector<128xf32>
    %58 = vector.multi_reduction <add>, %53, %cst_35 [1] : vector<128x128xf32> to vector<128xf32>
    %59 = vector.shape_cast %58 : vector<128xf32> to vector<128x1xf32>
    %cst_36 = arith.constant 3.125000e-02 : f32
    %60 = vector.broadcast %cst_36 : f32 to vector<128x1xf32>
    %61 = arith.mulf %59, %60 : vector<128x1xf32>
    %62 = vector.broadcast %61 : vector<128x1xf32> to vector<128x128xf32>
    %63 = arith.subf %53, %62 : vector<128x128xf32>
    %64 = vector.broadcast %4 : vector<1x128xf32> to vector<128x128xf32>
    %65 = arith.mulf %63, %64 : vector<128x128xf32>
    %66 = arith.mulf %65, %65 : vector<128x128xf32>
    %cst_37 = arith.constant dense<0.000000e+00> : vector<128xf32>
    %67 = vector.multi_reduction <add>, %66, %cst_37 [1] : vector<128x128xf32> to vector<128xf32>
    %68 = vector.shape_cast %67 : vector<128xf32> to vector<128x1xf32>
    %cst_38 = arith.constant 3.125000e-02 : f32
    %69 = vector.broadcast %cst_38 : f32 to vector<128x1xf32>
    %70 = arith.mulf %68, %69 : vector<128x1xf32>
    %cst_39 = arith.constant 9.99999974E-6 : f32
    %71 = vector.broadcast %cst_39 : f32 to vector<128x1xf32>
    %72 = arith.addf %70, %71 : vector<128x1xf32>
    %73 = math.rsqrt %72 : vector<128x1xf32>
    %74 = vector.broadcast %73 : vector<128x1xf32> to vector<128x128xf32>
    %75 = arith.mulf %65, %74 : vector<128x128xf32>
    %76 = vector.broadcast %55 : vector<1x128xf32> to vector<128x128xf32>
    %77 = arith.mulf %75, %76 : vector<128x128xf32>
    %78 = vector.broadcast %57 : vector<1x128xf32> to vector<128x128xf32>
    %79 = arith.addf %77, %78 : vector<128x128xf32>
    %cst_40 = arith.constant 0.000000e+00 : f32
    %80 = vector.broadcast %cst_40 : f32 to vector<128x128xf32>
    %81 = arith.maximumf %79, %80 : vector<128x128xf32>
    %82 = arith.truncf %81 : vector<128x128xf32> to vector<128x128xbf16>
    %c0_41 = arith.constant 0 : index
    %c0_42 = arith.constant 0 : index
    %83 = vector.load %arg2[%c0_41, %c0_42] : memref<8x128xbf16, #tpu.memory_space<vmem>>, vector<8x128xbf16>
    %cst_43 = arith.constant dense<0.000000e+00> : vector<8x128xf32>
    %84 = tpu.matmul %83, %82, %cst_43 {dimension_numbers = #tpu.dot_dimension_numbers<[1], [0], [0], [1], [0, 0, 1, 1], [], []>} : vector<8x128xbf16>, vector<128x128xbf16>, vector<8x128xf32> -> vector<8x128xf32>
    %85 = arith.truncf %84 : vector<8x128xf32> to vector<8x128xbf16>
    %c0_44 = arith.constant 0 : index
    %c0_45 = arith.constant 0 : index
    %c0_46 = arith.constant 0 : index
    %86 = vector.load %arg7[%c0_44, %c0_45, %c0_46] : memref<2x128x128xbf16, #tpu.memory_space<vmem>>, vector<1x128x128xbf16>
    %87 = vector.shape_cast %86 : vector<1x128x128xbf16> to vector<128x128xbf16>
    %cst_47 = arith.constant dense<0.000000e+00> : vector<8x128xf32>
    %88 = tpu.matmul %85, %87, %cst_47 {dimension_numbers = #tpu.dot_dimension_numbers<[1], [0], [0], [1], [0, 0, 1, 1], [], []>} : vector<8x128xbf16>, vector<128x128xbf16>, vector<8x128xf32> -> vector<8x128xf32>
    %c0_48 = arith.constant 0 : index
    %c0_49 = arith.constant 0 : index
    %c0_50 = arith.constant 0 : index
    %89 = vector.load %arg8[%c0_48, %c0_49, %c0_50] : memref<2x1x128xf32, #tpu.memory_space<vmem>>, vector<1x1x128xf32>
    %90 = vector.shape_cast %89 : vector<1x1x128xf32> to vector<1x128xf32>
    %91 = vector.broadcast %90 : vector<1x128xf32> to vector<8x128xf32>
    %92 = arith.addf %88, %91 : vector<8x128xf32>
    %c0_51 = arith.constant 0 : index
    %c0_52 = arith.constant 0 : index
    %c0_53 = arith.constant 0 : index
    %93 = vector.load %arg9[%c0_51, %c0_52, %c0_53] : memref<2x1x128xf32, #tpu.memory_space<vmem>>, vector<1x1x128xf32>
    %94 = vector.shape_cast %93 : vector<1x1x128xf32> to vector<1x128xf32>
    %c0_54 = arith.constant 0 : index
    %c0_55 = arith.constant 0 : index
    %c0_56 = arith.constant 0 : index
    %95 = vector.load %arg10[%c0_54, %c0_55, %c0_56] : memref<2x1x128xf32, #tpu.memory_space<vmem>>, vector<1x1x128xf32>
    %96 = vector.shape_cast %95 : vector<1x1x128xf32> to vector<1x128xf32>
    %cst_57 = arith.constant dense<0.000000e+00> : vector<8xf32>
    %97 = vector.multi_reduction <add>, %92, %cst_57 [1] : vector<8x128xf32> to vector<8xf32>
    %98 = vector.shape_cast %97 : vector<8xf32> to vector<8x1xf32>
    %cst_58 = arith.constant 3.125000e-02 : f32
    %99 = vector.broadcast %cst_58 : f32 to vector<8x1xf32>
    %100 = arith.mulf %98, %99 : vector<8x1xf32>
    %101 = vector.broadcast %100 : vector<8x1xf32> to vector<8x128xf32>
    %102 = arith.subf %92, %101 : vector<8x128xf32>
    %103 = vector.broadcast %4 : vector<1x128xf32> to vector<8x128xf32>
    %104 = arith.mulf %102, %103 : vector<8x128xf32>
    %105 = arith.mulf %104, %104 : vector<8x128xf32>
    %cst_59 = arith.constant dense<0.000000e+00> : vector<8xf32>
    %106 = vector.multi_reduction <add>, %105, %cst_59 [1] : vector<8x128xf32> to vector<8xf32>
    %107 = vector.shape_cast %106 : vector<8xf32> to vector<8x1xf32>
    %cst_60 = arith.constant 3.125000e-02 : f32
    %108 = vector.broadcast %cst_60 : f32 to vector<8x1xf32>
    %109 = arith.mulf %107, %108 : vector<8x1xf32>
    %cst_61 = arith.constant 9.99999974E-6 : f32
    %110 = vector.broadcast %cst_61 : f32 to vector<8x1xf32>
    %111 = arith.addf %109, %110 : vector<8x1xf32>
    %112 = math.rsqrt %111 : vector<8x1xf32>
    %113 = vector.broadcast %112 : vector<8x1xf32> to vector<8x128xf32>
    %114 = arith.mulf %104, %113 : vector<8x128xf32>
    %115 = vector.broadcast %94 : vector<1x128xf32> to vector<8x128xf32>
    %116 = arith.mulf %114, %115 : vector<8x128xf32>
    %117 = vector.broadcast %96 : vector<1x128xf32> to vector<8x128xf32>
    %118 = arith.addf %116, %117 : vector<8x128xf32>
    %cst_62 = arith.constant 0.000000e+00 : f32
    %119 = vector.broadcast %cst_62 : f32 to vector<8x128xf32>
    %120 = arith.maximumf %118, %119 : vector<8x128xf32>
    %121 = arith.truncf %120 : vector<8x128xf32> to vector<8x128xbf16>
    %c1_63 = arith.constant 1 : index
    %c0_64 = arith.constant 0 : index
    %c0_65 = arith.constant 0 : index
    %122 = vector.load %arg7[%c1_63, %c0_64, %c0_65] : memref<2x128x128xbf16, #tpu.memory_space<vmem>>, vector<1x128x128xbf16>
    %123 = vector.shape_cast %122 : vector<1x128x128xbf16> to vector<128x128xbf16>
    %cst_66 = arith.constant dense<0.000000e+00> : vector<8x128xf32>
    %124 = tpu.matmul %121, %123, %cst_66 {dimension_numbers = #tpu.dot_dimension_numbers<[1], [0], [0], [1], [0, 0, 1, 1], [], []>} : vector<8x128xbf16>, vector<128x128xbf16>, vector<8x128xf32> -> vector<8x128xf32>
    %c1_67 = arith.constant 1 : index
    %c0_68 = arith.constant 0 : index
    %c0_69 = arith.constant 0 : index
    %125 = vector.load %arg8[%c1_67, %c0_68, %c0_69] : memref<2x1x128xf32, #tpu.memory_space<vmem>>, vector<1x1x128xf32>
    %126 = vector.shape_cast %125 : vector<1x1x128xf32> to vector<1x128xf32>
    %127 = vector.broadcast %126 : vector<1x128xf32> to vector<8x128xf32>
    %128 = arith.addf %124, %127 : vector<8x128xf32>
    %c1_70 = arith.constant 1 : index
    %c0_71 = arith.constant 0 : index
    %c0_72 = arith.constant 0 : index
    %129 = vector.load %arg9[%c1_70, %c0_71, %c0_72] : memref<2x1x128xf32, #tpu.memory_space<vmem>>, vector<1x1x128xf32>
    %130 = vector.shape_cast %129 : vector<1x1x128xf32> to vector<1x128xf32>
    %c1_73 = arith.constant 1 : index
    %c0_74 = arith.constant 0 : index
    %c0_75 = arith.constant 0 : index
    %131 = vector.load %arg10[%c1_73, %c0_74, %c0_75] : memref<2x1x128xf32, #tpu.memory_space<vmem>>, vector<1x1x128xf32>
    %132 = vector.shape_cast %131 : vector<1x1x128xf32> to vector<1x128xf32>
    %cst_76 = arith.constant dense<0.000000e+00> : vector<8xf32>
    %133 = vector.multi_reduction <add>, %128, %cst_76 [1] : vector<8x128xf32> to vector<8xf32>
    %134 = vector.shape_cast %133 : vector<8xf32> to vector<8x1xf32>
    %cst_77 = arith.constant 3.125000e-02 : f32
    %135 = vector.broadcast %cst_77 : f32 to vector<8x1xf32>
    %136 = arith.mulf %134, %135 : vector<8x1xf32>
    %137 = vector.broadcast %136 : vector<8x1xf32> to vector<8x128xf32>
    %138 = arith.subf %128, %137 : vector<8x128xf32>
    %139 = vector.broadcast %4 : vector<1x128xf32> to vector<8x128xf32>
    %140 = arith.mulf %138, %139 : vector<8x128xf32>
    %141 = arith.mulf %140, %140 : vector<8x128xf32>
    %cst_78 = arith.constant dense<0.000000e+00> : vector<8xf32>
    %142 = vector.multi_reduction <add>, %141, %cst_78 [1] : vector<8x128xf32> to vector<8xf32>
    %143 = vector.shape_cast %142 : vector<8xf32> to vector<8x1xf32>
    %cst_79 = arith.constant 3.125000e-02 : f32
    %144 = vector.broadcast %cst_79 : f32 to vector<8x1xf32>
    %145 = arith.mulf %143, %144 : vector<8x1xf32>
    %cst_80 = arith.constant 9.99999974E-6 : f32
    %146 = vector.broadcast %cst_80 : f32 to vector<8x1xf32>
    %147 = arith.addf %145, %146 : vector<8x1xf32>
    %148 = math.rsqrt %147 : vector<8x1xf32>
    %149 = vector.broadcast %148 : vector<8x1xf32> to vector<8x128xf32>
    %150 = arith.mulf %140, %149 : vector<8x128xf32>
    %151 = vector.broadcast %130 : vector<1x128xf32> to vector<8x128xf32>
    %152 = arith.mulf %150, %151 : vector<8x128xf32>
    %153 = vector.broadcast %132 : vector<1x128xf32> to vector<8x128xf32>
    %154 = arith.addf %152, %153 : vector<8x128xf32>
    %cst_81 = arith.constant 0.000000e+00 : f32
    %155 = vector.broadcast %cst_81 : f32 to vector<8x128xf32>
    %156 = arith.maximumf %154, %155 : vector<8x128xf32>
    %157 = arith.truncf %156 : vector<8x128xf32> to vector<8x128xbf16>
    %c0_82 = arith.constant 0 : index
    %c0_83 = arith.constant 0 : index
    %158 = vector.load %arg11[%c0_82, %c0_83] : memref<128x128xbf16, #tpu.memory_space<vmem>>, vector<128x128xbf16>
    %cst_84 = arith.constant dense<0.000000e+00> : vector<8x128xf32>
    %159 = tpu.matmul %157, %158, %cst_84 {dimension_numbers = #tpu.dot_dimension_numbers<[1], [0], [0], [1], [0, 0, 1, 1], [], []>} : vector<8x128xbf16>, vector<128x128xbf16>, vector<8x128xf32> -> vector<8x128xf32>
    %c0_85 = arith.constant 0 : index
    %c0_86 = arith.constant 0 : index
    %160 = vector.load %arg12[%c0_85, %c0_86] : memref<1x128xf32, #tpu.memory_space<vmem>>, vector<1x128xf32>
    %161 = vector.broadcast %160 : vector<1x128xf32> to vector<8x128xf32>
    %162 = arith.addf %159, %161 : vector<8x128xf32>
    %c0_87 = arith.constant 0 : index
    %c0_88 = arith.constant 0 : index
    %163 = vector.load %arg13[%c0_87, %c0_88] : memref<8x128xf32, #tpu.memory_space<vmem>>, vector<8x128xf32>
    tpu.vector_store %arg13[%c0_87, %c0_88], %162 {strides = array<i32>} : memref<8x128xf32, #tpu.memory_space<vmem>>, vector<8x128xf32>,
    return
  }
}

</mosaic_0001>

<llo_original>
// kernel: tpu_custom_call.1
$region0: #{tpu_custom_call.1}
  #allocation0 [shape = 'u32[]', space=smem, size = 0x4, offset = 0x4, fixed_abs, tag = 'smem constant byte address 0x4 - core index']
  #allocation1 [shape = 'u32[144,128]{1,0:T(1,128)}', space=vmem, size = 0x12000, scoped, tag = 'internal scratch']
  %s0 = inlined_call_operand.hbm [shape: bf16[128,128], index: 0, kind: input, shape index: {}]
  %s1 = inlined_call_operand.hbm [shape: bf16[128,128], index: 1, kind: input, shape index: {}]
  %s2 = inlined_call_operand.vmem [shape: bf16[8,128], index: 2, kind: input, shape index: {}]
  %s3 = inlined_call_operand.hbm [shape: bf16[2,128,128], index: 3, kind: input, shape index: {}]
  %s4 = inlined_call_operand.vmem [shape: f32[2,1,128], index: 4, kind: input, shape index: {}]
  %s5 = inlined_call_operand.vmem [shape: f32[2,1,128], index: 5, kind: input, shape index: {}]
  %s6 = inlined_call_operand.vmem [shape: f32[2,1,128], index: 6, kind: input, shape index: {}]
  %s7 = inlined_call_operand.hbm [shape: bf16[2,128,128], index: 7, kind: input, shape index: {}]
  %s8 = inlined_call_operand.vmem [shape: f32[2,1,128], index: 8, kind: input, shape index: {}]
  %s9 = inlined_call_operand.vmem [shape: f32[2,1,128], index: 9, kind: input, shape index: {}]
  %s10 = inlined_call_operand.vmem [shape: f32[2,1,128], index: 10, kind: input, shape index: {}]
  %s11 = inlined_call_operand.hbm [shape: bf16[128,128], index: 11, kind: input, shape index: {}]
  %s12 = inlined_call_operand.vmem [shape: f32[1,128], index: 12, kind: input, shape index: {}]
  %s13 = inlined_call_operand.hbm [shape: f32[8,128], index: 13, kind: output, shape index: {}]
  %s14 = sld [smem:[#allocation0]]
  $region82: #{tpu_custom_call.1} parent=0
    _
  %s16 = ssub.s32 1, %s14
  %s17 = scalar_select 0, %s16, %s14
  $region1: #{tpu_custom_call.1} parent=0
    #allocation2 [shape = 'u8[32768]{0}', space=vmem, size = 0x8000, scoped, tag = 'input window, operand 0, single buffered']
    #allocation3 [shape = 's32[1]{0}', space=sflag, size = 0x4, scoped, tag = 'scoped memory for tpu_custom_call.1']
    #allocation4 [shape = 's32[1]{0}', space=sflag, size = 0x4, scoped, tag = 'scoped memory for tpu_custom_call.1']
    #allocation5 [shape = 'u8[32768]{0}', space=vmem, size = 0x8000, scoped, tag = 'input window, operand 1, single buffered']
    #allocation6 [shape = 's32[1]{0}', space=sflag, size = 0x4, scoped, tag = 'scoped memory for tpu_custom_call.1']
    #allocation7 [shape = 'u8[65536]{0}', space=vmem, size = 0x10000, scoped, tag = 'input window, operand 3, single buffered']
    #allocation8 [shape = 'u8[65536]{0}', space=vmem, size = 0x10000, scoped, tag = 'input window, operand 7, single buffered']
    #allocation9 [shape = 's32[1]{0}', space=sflag, size = 0x4, scoped, tag = 'scoped memory for tpu_custom_call.1']
    #allocation10 [shape = 'u8[32768]{0}', space=vmem, size = 0x8000, scoped, tag = 'input window, operand 11, single buffered']
    #allocation11 [shape = 'u8[4096]{0}', space=vmem, size = 0x1000, scoped, tag = 'output window, operand 0, single buffered']
    %18 = vsyncpa [#allocation3], 0
    %19 = vsyncpa [#allocation6], 0
    %20 = vsyncpa [#allocation9], 0
    %21 = vsyncpa [#allocation4], 0
    // Predicated region
    $region2: #{tpu_custom_call.1} parent=1 // pred_check
      _
    $region3: #{tpu_custom_call.1} parent=1 // pred_check_branch
      %23 = sbr.rel (0) target = $region5
    $region4: #{tpu_custom_call.1} parent=1 // pred_region
      %s25 = ssub.s32 1024, 1024
      %26 = vsyncadd [#allocation3], %s25
      %s27 = sshll.u32 [#allocation2], 4
      %s28 = int_to_ptr.vmem [resolvable:$true] %s27
      %33 = dma.hbm_to_vmem [thread:$0]  %s0, 1024, %s28, [#allocation3], 64, 64, 4
    $region5: #{tpu_custom_call.1} parent=1 // pred_fallthru
      _
    // Predicated region
    $region6: #{tpu_custom_call.1} parent=1 // pred_check
      _
    $region7: #{tpu_custom_call.1} parent=1 // pred_check_branch
      %35 = sbr.rel (0) target = $region9
    $region8: #{tpu_custom_call.1} parent=1 // pred_region
      %s37 = ssub.s32 1024, 1024
      %38 = vsyncadd [#allocation6], %s37
      %s39 = sshll.u32 [#allocation5], 4
      %s40 = int_to_ptr.vmem [resolvable:$true] %s39
      %45 = dma.hbm_to_vmem [thread:$0]  %s1, 1024, %s40, [#allocation6], 64, 64, 4
    $region9: #{tpu_custom_call.1} parent=1 // pred_fallthru
      _
    // Predicated region
    $region10: #{tpu_custom_call.1} parent=1 // pred_check
      _
    $region11: #{tpu_custom_call.1} parent=1 // pred_check_branch
      %47 = sbr.rel (0) target = $region13
    $region12: #{tpu_custom_call.1} parent=1 // pred_region
      _
    $region13: #{tpu_custom_call.1} parent=1 // pred_fallthru
      _
    // Predicated region
    $region14: #{tpu_custom_call.1} parent=1 // pred_check
      _
    $region15: #{tpu_custom_call.1} parent=1 // pred_check_branch
      %49 = sbr.rel (0) target = $region17
    $region16: #{tpu_custom_call.1} parent=1 // pred_region
      %s51 = ssub.s32 2048, 2048
      %52 = vsyncadd [#allocation6], %s51
      %s53 = sshll.u32 [#allocation7], 4
      %s54 = int_to_ptr.vmem [resolvable:$true] %s53
      %59 = dma.hbm_to_vmem [thread:$0]  %s3, 2048, %s54, [#allocation6], 64, 64, 4
    $region17: #{tpu_custom_call.1} parent=1 // pred_fallthru
      _
    // Predicated region
    $region18: #{tpu_custom_call.1} parent=1 // pred_check
      _
    $region19: #{tpu_custom_call.1} parent=1 // pred_check_branch
      %61 = sbr.rel (0) target = $region21
    $region20: #{tpu_custom_call.1} parent=1 // pred_region
      _
    $region21: #{tpu_custom_call.1} parent=1 // pred_fallthru
      _
    // Predicated region
    $region22: #{tpu_custom_call.1} parent=1 // pred_check
      _
    $region23: #{tpu_custom_call.1} parent=1 // pred_check_branch
      %63 = sbr.rel (0) target = $region25
    $region24: #{tpu_custom_call.1} parent=1 // pred_region
      _
    $region25: #{tpu_custom_call.1} parent=1 // pred_fallthru
      _
    // Predicated region
    $region26: #{tpu_custom_call.1} parent=1 // pred_check
      _
    $region27: #{tpu_custom_call.1} parent=1 // pred_check_branch
      %65 = sbr.rel (0) target = $region29
    $region28: #{tpu_custom_call.1} parent=1 // pred_region
      _
    $region29: #{tpu_custom_call.1} parent=1 // pred_fallthru
      _
    // Predicated region
    $region30: #{tpu_custom_call.1} parent=1 // pred_check
      _
    $region31: #{tpu_custom_call.1} parent=1 // pred_check_branch
      %67 = sbr.rel (0) target = $region33
    $region32: #{tpu_custom_call.1} parent=1 // pred_region
      %s69 = ssub.s32 2048, 2048
      %70 = vsyncadd [#allocation9], %s69
      %s71 = sshll.u32 [#allocation8], 4
      %s72 = int_to_ptr.vmem [resolvable:$true] %s71
      %77 = dma.hbm_to_vmem [thread:$0]  %s7, 2048, %s72, [#allocation9], 64, 64, 4
    $region33: #{tpu_custom_call.1} parent=1 // pred_fallthru
      _
    // Predicated region
    $region34: #{tpu_custom_call.1} parent=1 // pred_check
      _
    $region35: #{tpu_custom_call.1} parent=1 // pred_check_branch
      %79 = sbr.rel (0) target = $region37
    $region36: #{tpu_custom_call.1} parent=1 // pred_region
      _
    $region37: #{tpu_custom_call.1} parent=1 // pred_fallthru
      _
    // Predicated region
    $region38: #{tpu_custom_call.1} parent=1 // pred_check
      _
    $region39: #{tpu_custom_call.1} parent=1 // pred_check_branch
      %81 = sbr.rel (0) target = $region41
    $region40: #{tpu_custom_call.1} parent=1 // pred_region
      _
    $region41: #{tpu_custom_call.1} parent=1 // pred_fallthru
      _
    // Predicated region
    $region42: #{tpu_custom_call.1} parent=1 // pred_check
      _
    $region43: #{tpu_custom_call.1} parent=1 // pred_check_branch
      %83 = sbr.rel (0) target = $region45
    $region44: #{tpu_custom_call.1} parent=1 // pred_region
      _
    $region45: #{tpu_custom_call.1} parent=1 // pred_fallthru
      _
    // Predicated region
    $region46: #{tpu_custom_call.1} parent=1 // pred_check
      _
    $region47: #{tpu_custom_call.1} parent=1 // pred_check_branch
      %85 = sbr.rel (0) target = $region49
    $region48: #{tpu_custom_call.1} parent=1 // pred_region
      %s87 = ssub.s32 1024, 1024
      %88 = vsyncadd [#allocation9], %s87
      %s89 = sshll.u32 [#allocation10], 4
      %s90 = int_to_ptr.vmem [resolvable:$true] %s89
      %95 = dma.hbm_to_vmem [thread:$0]  %s11, 1024, %s90, [#allocation9], 64, 64, 4
    $region49: #{tpu_custom_call.1} parent=1 // pred_fallthru
      _
    // Predicated region
    $region50: #{tpu_custom_call.1} parent=1 // pred_check
      _
    $region51: #{tpu_custom_call.1} parent=1 // pred_check_branch
      %97 = sbr.rel (0) target = $region53
    $region52: #{tpu_custom_call.1} parent=1 // pred_region
      _
    $region53: #{tpu_custom_call.1} parent=1 // pred_fallthru
      _
    // Predicated region
    $region54: #{tpu_custom_call.1} parent=1 // pred_check
      _
    $region55: #{tpu_custom_call.1} parent=1 // pred_check_branch
      %99 = sbr.rel (0) target = $region57
    $region56: #{tpu_custom_call.1} parent=1 // pred_region
      %100 = dma.done [#allocation3], 1024
    $region57: #{tpu_custom_call.1} parent=1 // pred_fallthru
      _
    // Predicated region
    $region58: #{tpu_custom_call.1} parent=1 // pred_check
      _
    $region59: #{tpu_custom_call.1} parent=1 // pred_check_branch
      %102 = sbr.rel (0) target = $region61
    $region60: #{tpu_custom_call.1} parent=1 // pred_region
      %103 = dma.done [#allocation6], 1024
    $region61: #{tpu_custom_call.1} parent=1 // pred_fallthru
      _
    // Predicated region
    $region62: #{tpu_custom_call.1} parent=1 // pred_check
      _
    $region63: #{tpu_custom_call.1} parent=1 // pred_check_branch
      %105 = sbr.rel (0) target = $region65
    $region64: #{tpu_custom_call.1} parent=1 // pred_region
      %106 = dma.done [#allocation6], 2048
    $region65: #{tpu_custom_call.1} parent=1 // pred_fallthru
      _
    // Predicated region
    $region66: #{tpu_custom_call.1} parent=1 // pred_check
      _
    $region67: #{tpu_custom_call.1} parent=1 // pred_check_branch
      %108 = sbr.rel (0) target = $region69
    $region68: #{tpu_custom_call.1} parent=1 // pred_region
      %109 = dma.done [#allocation9], 2048
    $region69: #{tpu_custom_call.1} parent=1 // pred_fallthru
      _
    // Predicated region
    $region70: #{tpu_custom_call.1} parent=1 // pred_check
      _
    $region71: #{tpu_custom_call.1} parent=1 // pred_check_branch
      %111 = sbr.rel (0) target = $region73
    $region72: #{tpu_custom_call.1} parent=1 // pred_region
      %112 = dma.done [#allocation9], 1024
    $region73: #{tpu_custom_call.1} parent=1 // pred_fallthru
      _
    %v114 = vlaneseq
    %v115 = vand.u32 %v114, 127
    %vm116 = vcmp.lt.s32.totalorder %v115, 32
    %v117 = vsel %vm116, 1, 0
    %v118 = vcvt.s32.f32 %v117
    %v119 = vld [vmem:[#allocation2] sm:$0xf]
    %v120 = vld [vmem:[#allocation2 + $0x4] sm:$0xf]
    %v121 = vld [vmem:[#allocation2 + $0x8] sm:$0xf]
    %v122 = vld [vmem:[#allocation2 + $0xc] sm:$0xf]
    %v123 = vld [vmem:[#allocation2 + $0x10] sm:$0xf]
    %v124 = vld [vmem:[#allocation2 + $0x14] sm:$0xf]
    %v125 = vld [vmem:[#allocation2 + $0x18] sm:$0xf]
    %v126 = vld [vmem:[#allocation2 + $0x1c] sm:$0xf]
    %v127 = vld [vmem:[#allocation2 + $0x20] sm:$0xf]
    %v128 = vld [vmem:[#allocation2 + $0x24] sm:$0xf]
    %v129 = vld [vmem:[#allocation2 + $0x28] sm:$0xf]
    %v130 = vld [vmem:[#allocation2 + $0x2c] sm:$0xf]
    %v131 = vld [vmem:[#allocation2 + $0x30] sm:$0xf]
    %v132 = vld [vmem:[#allocation2 + $0x34] sm:$0xf]
    %v133 = vld [vmem:[#allocation2 + $0x38] sm:$0xf]
    %v134 = vld [vmem:[#allocation2 + $0x3c] sm:$0xf]
    %v135 = vld [vmem:[#allocation5] sm:$0xf]
    %v136 = vld [vmem:[#allocation5 + $0x4] sm:$0xf]
    %v137 = vld [vmem:[#allocation5 + $0x8] sm:$0xf]
    %v138 = vld [vmem:[#allocation5 + $0xc] sm:$0xf]
    %v139 = vld [vmem:[#allocation5 + $0x10] sm:$0xf]
    %v140 = vld [vmem:[#allocation5 + $0x14] sm:$0xf]
    %v141 = vld [vmem:[#allocation5 + $0x18] sm:$0xf]
    %v142 = vld [vmem:[#allocation5 + $0x1c] sm:$0xf]
    %v143 = vld [vmem:[#allocation5 + $0x20] sm:$0xf]
    %v144 = vld [vmem:[#allocation5 + $0x24] sm:$0xf]
    %v145 = vld [vmem:[#allocation5 + $0x28] sm:$0xf]
    %v146 = vld [vmem:[#allocation5 + $0x2c] sm:$0xf]
    %v147 = vld [vmem:[#allocation5 + $0x30] sm:$0xf]
    %v148 = vld [vmem:[#allocation5 + $0x34] sm:$0xf]
    %v149 = vld [vmem:[#allocation5 + $0x38] sm:$0xf]
    %v150 = vld [vmem:[#allocation5 + $0x3c] sm:$0xf]
    %v151 = vld [vmem:[#allocation7] sm:$0xf]
    %v152 = vld [vmem:[#allocation7 + $0x4] sm:$0xf]
    %v153 = vld [vmem:[#allocation7 + $0x8] sm:$0xf]
    %v154 = vld [vmem:[#allocation7 + $0xc] sm:$0xf]
    %v155 = vld [vmem:[#allocation7 + $0x10] sm:$0xf]
    %v156 = vld [vmem:[#allocation7 + $0x14] sm:$0xf]
    %v157 = vld [vmem:[#allocation7 + $0x18] sm:$0xf]
    %v158 = vld [vmem:[#allocation7 + $0x1c] sm:$0xf]
    %v159 = vld [vmem:[#allocation7 + $0x20] sm:$0xf]
    %v160 = vld [vmem:[#allocation7 + $0x24] sm:$0xf]
    %v161 = vld [vmem:[#allocation7 + $0x28] sm:$0xf]
    %v162 = vld [vmem:[#allocation7 + $0x2c] sm:$0xf]
    %v163 = vld [vmem:[#allocation7 + $0x30] sm:$0xf]
    %v164 = vld [vmem:[#allocation7 + $0x34] sm:$0xf]
    %v165 = vld [vmem:[#allocation7 + $0x38] sm:$0xf]
    %v166 = vld [vmem:[#allocation7 + $0x3c] sm:$0xf]
    %v183 = vunpack.c.l.b16 %v135
    %v184 = vunpack.c.l.b16 %v136
    %v185 = vunpack.c.l.b16 %v137
    %v186 = vunpack.c.l.b16 %v138
    %v187 = vunpack.c.l.b16 %v139
    %v188 = vunpack.c.l.b16 %v140
    %v189 = vunpack.c.l.b16 %v141
    %v190 = vunpack.c.l.b16 %v142
    %v191 = vunpack.c.l.b16 %v143
    %v192 = vunpack.c.l.b16 %v144
    %v193 = vunpack.c.l.b16 %v145
    %v194 = vunpack.c.l.b16 %v146
    %v195 = vunpack.c.l.b16 %v147
    %v196 = vunpack.c.l.b16 %v148
    %v197 = vunpack.c.l.b16 %v149
    %v198 = vunpack.c.l.b16 %v150
    %v199 = vpack.c.b16 %v184, %v183
    %v200 = vpack.c.b16 %v186, %v185
    %v201 = vpack.c.b16 %v188, %v187
    %v202 = vpack.c.b16 %v190, %v189
    %v203 = vpack.c.b16 %v192, %v191
    %v204 = vpack.c.b16 %v194, %v193
    %v205 = vpack.c.b16 %v196, %v195
    %v206 = vpack.c.b16 %v198, %v197
    %v231 = vunpack.c.l.b16 %v151
    %v232 = vunpack.c.l.b16 %v152
    %v233 = vunpack.c.l.b16 %v153
    %v234 = vunpack.c.l.b16 %v154
    %v235 = vunpack.c.l.b16 %v155
    %v236 = vunpack.c.l.b16 %v156
    %v237 = vunpack.c.l.b16 %v157
    %v238 = vunpack.c.l.b16 %v158
    %v239 = vunpack.c.l.b16 %v159
    %v240 = vunpack.c.l.b16 %v160
    %v241 = vunpack.c.l.b16 %v161
    %v242 = vunpack.c.l.b16 %v162
    %v243 = vunpack.c.l.b16 %v163
    %v244 = vunpack.c.l.b16 %v164
    %v245 = vunpack.c.l.b16 %v165
    %v246 = vunpack.c.l.b16 %v166
    %v247 = vpack.c.b16 %v232, %v231
    %v248 = vpack.c.b16 %v234, %v233
    %v249 = vpack.c.b16 %v236, %v235
    %v250 = vpack.c.b16 %v238, %v237
    %v251 = vpack.c.b16 %v240, %v239
    %v252 = vpack.c.b16 %v242, %v241
    %v253 = vpack.c.b16 %v244, %v243
    %v254 = vpack.c.b16 %v246, %v245
    %263 = vmatprep.subr.bf16.mxu0 0
    %264 = vmatpush1.bf16.msra.mxu0 %v247
    %265 = vmatprep.subr.bf16.mxu0 0
    %266 = vmatpush1.bf16.msra.mxu0 %v248
    %267 = vmatprep.subr.bf16.mxu0 0
    %268 = vmatpush1.bf16.msra.mxu0 %v249
    %269 = vmatprep.subr.bf16.mxu0 0
    %270 = vmatpush1.bf16.msra.mxu0 %v250
    %271 = vmatprep.subr.bf16.mxu0 0
    %272 = vmatpush1.bf16.msra.mxu0 %v251
    %273 = vmatprep.subr.bf16.mxu0 0
    %274 = vmatpush1.bf16.msra.mxu0 %v252
    %275 = vmatprep.subr.bf16.mxu0 0
    %276 = vmatpush1.bf16.msra.mxu0 %v253
    %277 = vmatprep.subr.bf16.mxu0 0
    %278 = vmatpush1.bf16.msra.mxu0 %v254
    %279 = vmatprep.subr.bf16.mxu0 0
    %280 = vmatpush1.bf16.msra.mxu0 0
    %281 = vmatprep.subr.bf16.mxu0 0
    %282 = vmatpush1.bf16.msra.mxu0 0
    %283 = vmatprep.subr.bf16.mxu0 0
    %284 = vmatpush1.bf16.msra.mxu0 0
    %285 = vmatprep.subr.bf16.mxu0 0
    %286 = vmatpush1.bf16.msra.mxu0 0
    %287 = vmatprep.subr.bf16.mxu0 0
    %288 = vmatpush1.bf16.msra.mxu0 0
    %289 = vmatprep.subr.bf16.mxu0 0
    %290 = vmatpush1.bf16.msra.mxu0 0
    %291 = vmatprep.subr.bf16.mxu0 0
    %292 = vmatpush1.bf16.msra.mxu0 0
    %293 = vmatprep.subr.bf16.mxu0 0
    %294 = vmatpush1.bf16.msra.mxu0 0
    %295 = vmatprep.mubr.bf16.mxu0 0
    %296 = vmatmul.mubr.bf16.gmra.mrb[0].mxu0 %v199
    %v297 = vpop.f32.mrb[0].mxu0
    %v298 = vadd.f32 0.0, %v297
    %v299 = vpop.f32.mrb[0].mxu0
    %v300 = vpop.f32.mrb[0].mxu0
    %v301 = vadd.f32 0.0, %v300
    %v302 = vpop.f32.mrb[0].mxu0
    %303 = vmatprep.mubr.bf16.mxu0 0
    %304 = vmatmul.mubr.bf16.gmra.mrb[0].mxu0 %v200
    %v305 = vpop.f32.mrb[0].mxu0
    %v306 = vadd.f32 0.0, %v305
    %v307 = vpop.f32.mrb[0].mxu0
    %v308 = vpop.f32.mrb[0].mxu0
    %v309 = vadd.f32 0.0, %v308
    %v310 = vpop.f32.mrb[0].mxu0
    %311 = vmatprep.mubr.bf16.mxu0 0
    %312 = vmatmul.mubr.bf16.gmra.mrb[0].mxu0 %v201
    %v313 = vpop.f32.mrb[0].mxu0
    %v314 = vadd.f32 0.0, %v313
    %v315 = vpop.f32.mrb[0].mxu0
    %v316 = vpop.f32.mrb[0].mxu0
    %v317 = vadd.f32 0.0, %v316
    %v318 = vpop.f32.mrb[0].mxu0
    %319 = vmatprep.mubr.bf16.mxu0 0
    %320 = vmatmul.mubr.bf16.gmra.mrb[0].mxu0 %v202
    %v321 = vpop.f32.mrb[0].mxu0
    %v322 = vadd.f32 0.0, %v321
    %v323 = vpop.f32.mrb[0].mxu0
    %v324 = vpop.f32.mrb[0].mxu0
    %v325 = vadd.f32 0.0, %v324
    %v326 = vpop.f32.mrb[0].mxu0
    %327 = vmatprep.mubr.bf16.mxu0 0
    %328 = vmatmul.mubr.bf16.gmra.mrb[0].mxu0 %v203
    %v329 = vpop.f32.mrb[0].mxu0
    %v330 = vadd.f32 0.0, %v329
    %v331 = vpop.f32.mrb[0].mxu0
    %v332 = vpop.f32.mrb[0].mxu0
    %v333 = vadd.f32 0.0, %v332
    %v334 = vpop.f32.mrb[0].mxu0
    %335 = vmatprep.mubr.bf16.mxu0 0
    %336 = vmatmul.mubr.bf16.gmra.mrb[0].mxu0 %v204
    %v337 = vpop.f32.mrb[0].mxu0
    %v338 = vadd.f32 0.0, %v337
    %v339 = vpop.f32.mrb[0].mxu0
    %v340 = vpop.f32.mrb[0].mxu0
    %v341 = vadd.f32 0.0, %v340
    %v342 = vpop.f32.mrb[0].mxu0
    %343 = vmatprep.mubr.bf16.mxu0 0
    %344 = vmatmul.mubr.bf16.gmra.mrb[0].mxu0 %v205
    %v345 = vpop.f32.mrb[0].mxu0
    %v346 = vadd.f32 0.0, %v345
    %v347 = vpop.f32.mrb[0].mxu0
    %v348 = vpop.f32.mrb[0].mxu0
    %v349 = vadd.f32 0.0, %v348
    %v350 = vpop.f32.mrb[0].mxu0
    %351 = vmatprep.mubr.bf16.mxu0 0
    %352 = vmatmul.mubr.bf16.gmra.mrb[0].mxu0 %v206
    %v353 = vpop.f32.mrb[0].mxu0
    %v354 = vadd.f32 0.0, %v353
    %v355 = vpop.f32.mrb[0].mxu0
    %v356 = vpop.f32.mrb[0].mxu0
    %v357 = vadd.f32 0.0, %v356
    %v358 = vpop.f32.mrb[0].mxu0
    %359 = vdwg.mxu0
    %v360 = vpack.c.bf16 %v301, %v298
    %v361 = vpack.c.bf16 %v309, %v306
    %v362 = vpack.c.bf16 %v317, %v314
    %v363 = vpack.c.bf16 %v325, %v322
    %v364 = vpack.c.bf16 %v333, %v330
    %v365 = vpack.c.bf16 %v341, %v338
    %v366 = vpack.c.bf16 %v349, %v346
    %v367 = vpack.c.bf16 %v357, %v354
    %v368 = vld [vmem:[%s4] sm:$0x1]
    %v370 = vlaneseq
    %v371 = vshrl.u32 %v370, 7
    %v372 = vsub.s32 0, %v371
    %v373 = vrot.slane %v368, %v372
    %v391 = vunpack.c.l.b16 %v119
    %v392 = vunpack.c.l.b16 %v120
    %v393 = vunpack.c.l.b16 %v121
    %v394 = vunpack.c.l.b16 %v122
    %v395 = vunpack.c.l.b16 %v123
    %v396 = vunpack.c.l.b16 %v124
    %v397 = vunpack.c.l.b16 %v125
    %v398 = vunpack.c.l.b16 %v126
    %v399 = vunpack.c.l.b16 %v127
    %v400 = vunpack.c.l.b16 %v128
    %v401 = vunpack.c.l.b16 %v129
    %v402 = vunpack.c.l.b16 %v130
    %v403 = vunpack.c.l.b16 %v131
    %v404 = vunpack.c.l.b16 %v132
    %v405 = vunpack.c.l.b16 %v133
    %v406 = vunpack.c.l.b16 %v134
    %v407 = vpack.c.b16 %v392, %v391
    %v408 = vpack.c.b16 %v394, %v393
    %v409 = vpack.c.b16 %v396, %v395
    %v410 = vpack.c.b16 %v398, %v397
    %v411 = vpack.c.b16 %v400, %v399
    %v412 = vpack.c.b16 %v402, %v401
    %v413 = vpack.c.b16 %v404, %v403
    %v414 = vpack.c.b16 %v406, %v405
    %423 = vmatprep.subr.bf16.mxu0 0
    %424 = vmatpush1.bf16.msra.mxu0 %v360
    %425 = vmatprep.subr.bf16.mxu0 0
    %426 = vmatpush1.bf16.msra.mxu0 %v361
    %427 = vmatprep.subr.bf16.mxu0 0
    %428 = vmatpush1.bf16.msra.mxu0 %v362
    %429 = vmatprep.subr.bf16.mxu0 0
    %430 = vmatpush1.bf16.msra.mxu0 %v363
    %431 = vmatprep.subr.bf16.mxu0 0
    %432 = vmatpush1.bf16.msra.mxu0 %v364
    %433 = vmatprep.subr.bf16.mxu0 0
    %434 = vmatpush1.bf16.msra.mxu0 %v365
    %435 = vmatprep.subr.bf16.mxu0 0
    %436 = vmatpush1.bf16.msra.mxu0 %v366
    %437 = vmatprep.subr.bf16.mxu0 0
    %438 = vmatpush1.bf16.msra.mxu0 %v367
    %439 = vmatprep.subr.bf16.mxu0 0
    %440 = vmatpush1.bf16.msra.mxu0 0
    %441 = vmatprep.subr.bf16.mxu0 0
    %442 = vmatpush1.bf16.msra.mxu0 0
    %443 = vmatprep.subr.bf16.mxu0 0
    %444 = vmatpush1.bf16.msra.mxu0 0
    %445 = vmatprep.subr.bf16.mxu0 0
    %446 = vmatpush1.bf16.msra.mxu0 0
    %447 = vmatprep.subr.bf16.mxu0 0
    %448 = vmatpush1.bf16.msra.mxu0 0
    %449 = vmatprep.subr.bf16.mxu0 0
    %450 = vmatpush1.bf16.msra.mxu0 0
    %451 = vmatprep.subr.bf16.mxu0 0
    %452 = vmatpush1.bf16.msra.mxu0 0
    %453 = vmatprep.subr.bf16.mxu0 0
    %454 = vmatpush1.bf16.msra.mxu0 0
    %455 = vmatprep.mubr.bf16.mxu0 0
    %456 = vmatmul.mubr.bf16.gmra.mrb[0].mxu0 %v407
    %v457 = vpop.f32.mrb[0].mxu0
    %v458 = vadd.f32 %v373, %v457
    %v459 = vpop.f32.mrb[0].mxu0
    %v460 = vpop.f32.mrb[0].mxu0
    %v461 = vadd.f32 %v373, %v460
    %v462 = vpop.f32.mrb[0].mxu0
    %463 = vmatprep.mubr.bf16.mxu0 0
    %464 = vmatmul.mubr.bf16.gmra.mrb[0].mxu0 %v408
    %v465 = vpop.f32.mrb[0].mxu0
    %v466 = vadd.f32 %v373, %v465
    %v467 = vpop.f32.mrb[0].mxu0
    %v468 = vpop.f32.mrb[0].mxu0
    %v469 = vadd.f32 %v373, %v468
    %v470 = vpop.f32.mrb[0].mxu0
    %471 = vmatprep.mubr.bf16.mxu0 0
    %472 = vmatmul.mubr.bf16.gmra.mrb[0].mxu0 %v409
    %v473 = vpop.f32.mrb[0].mxu0
    %v474 = vadd.f32 %v373, %v473
    %v475 = vpop.f32.mrb[0].mxu0
    %v476 = vpop.f32.mrb[0].mxu0
    %v477 = vadd.f32 %v373, %v476
    %v478 = vpop.f32.mrb[0].mxu0
    %479 = vmatprep.mubr.bf16.mxu0 0
    %480 = vmatmul.mubr.bf16.gmra.mrb[0].mxu0 %v410
    %v481 = vpop.f32.mrb[0].mxu0
    %v482 = vadd.f32 %v373, %v481
    %v483 = vpop.f32.mrb[0].mxu0
    %v484 = vpop.f32.mrb[0].mxu0
    %v485 = vadd.f32 %v373, %v484
    %v486 = vpop.f32.mrb[0].mxu0
    %487 = vmatprep.mubr.bf16.mxu0 0
    %488 = vmatmul.mubr.bf16.gmra.mrb[0].mxu0 %v411
    %v489 = vpop.f32.mrb[0].mxu0
    %v490 = vadd.f32 %v373, %v489
    %v491 = vpop.f32.mrb[0].mxu0
    %v492 = vpop.f32.mrb[0].mxu0
    %v493 = vadd.f32 %v373, %v492
    %v494 = vpop.f32.mrb[0].mxu0
    %495 = vmatprep.mubr.bf16.mxu0 0
    %496 = vmatmul.mubr.bf16.gmra.mrb[0].mxu0 %v412
    %v497 = vpop.f32.mrb[0].mxu0
    %v498 = vadd.f32 %v373, %v497
    %v499 = vpop.f32.mrb[0].mxu0
    %v500 = vpop.f32.mrb[0].mxu0
    %v501 = vadd.f32 %v373, %v500
    %v502 = vpop.f32.mrb[0].mxu0
    %503 = vmatprep.mubr.bf16.mxu0 0
    %504 = vmatmul.mubr.bf16.gmra.mrb[0].mxu0 %v413
    %v505 = vpop.f32.mrb[0].mxu0
    %v506 = vadd.f32 %v373, %v505
    %v507 = vpop.f32.mrb[0].mxu0
    %v508 = vpop.f32.mrb[0].mxu0
    %v509 = vadd.f32 %v373, %v508
    %v510 = vpop.f32.mrb[0].mxu0
    %511 = vmatprep.mubr.bf16.mxu0 0
    %512 = vmatmul.mubr.bf16.gmra.mrb[0].mxu0 %v414
    %v513 = vpop.f32.mrb[0].mxu0
    %v514 = vadd.f32 %v373, %v513
    %v515 = vpop.f32.mrb[0].mxu0
    %v516 = vpop.f32.mrb[0].mxu0
    %v517 = vadd.f32 %v373, %v516
    %v518 = vpop.f32.mrb[0].mxu0
    %519 = vdwg.mxu0
    %v520 = vld [vmem:[%s5] sm:$0x1]
    %v521 = vld [vmem:[%s6] sm:$0x1]
    %522 = vadd.xlane.f32.xlu0 %v458
    %v523 = vpop.xlane.xlu0 %522
    %524 = vadd.xlane.f32.xlu0 %v461
    %v525 = vpop.xlane.xlu0 %524
    %526 = vadd.xlane.f32.xlu0 %v466
    %v527 = vpop.xlane.xlu0 %526
    %528 = vadd.xlane.f32.xlu0 %v469
    %v529 = vpop.xlane.xlu0 %528
    %530 = vadd.xlane.f32.xlu0 %v474
    %v531 = vpop.xlane.xlu0 %530
    %532 = vadd.xlane.f32.xlu0 %v477
    %v533 = vpop.xlane.xlu0 %532
    %534 = vadd.xlane.f32.xlu0 %v482
    %v535 = vpop.xlane.xlu0 %534
    %536 = vadd.xlane.f32.xlu0 %v485
    %v537 = vpop.xlane.xlu0 %536
    %538 = vadd.xlane.f32.xlu0 %v490
    %v539 = vpop.xlane.xlu0 %538
    %540 = vadd.xlane.f32.xlu0 %v493
    %v541 = vpop.xlane.xlu0 %540
    %542 = vadd.xlane.f32.xlu0 %v498
    %v543 = vpop.xlane.xlu0 %542
    %544 = vadd.xlane.f32.xlu0 %v501
    %v545 = vpop.xlane.xlu0 %544
    %546 = vadd.xlane.f32.xlu0 %v506
    %v547 = vpop.xlane.xlu0 %546
    %548 = vadd.xlane.f32.xlu0 %v509
    %v549 = vpop.xlane.xlu0 %548
    %550 = vadd.xlane.f32.xlu0 %v514
    %v551 = vpop.xlane.xlu0 %550
    %552 = vadd.xlane.f32.xlu0 %v517
    %v553 = vpop.xlane.xlu0 %552
    %v554 = vmul.f32 %v523, 0.03125
    %v555 = vmul.f32 %v525, 0.03125
    %v556 = vmul.f32 %v527, 0.03125
    %v557 = vmul.f32 %v529, 0.03125
    %v558 = vmul.f32 %v531, 0.03125
    %v559 = vmul.f32 %v533, 0.03125
    %v560 = vmul.f32 %v535, 0.03125
    %v561 = vmul.f32 %v537, 0.03125
    %v562 = vmul.f32 %v539, 0.03125
    %v563 = vmul.f32 %v541, 0.03125
    %v564 = vmul.f32 %v543, 0.03125
    %v565 = vmul.f32 %v545, 0.03125
    %v566 = vmul.f32 %v547, 0.03125
    %v567 = vmul.f32 %v549, 0.03125
    %v568 = vmul.f32 %v551, 0.03125
    %v569 = vmul.f32 %v553, 0.03125
    %v570 = vsub.f32 %v458, %v554
    %v571 = vsub.f32 %v461, %v555
    %v572 = vsub.f32 %v466, %v556
    %v573 = vsub.f32 %v469, %v557
    %v574 = vsub.f32 %v474, %v558
    %v575 = vsub.f32 %v477, %v559
    %v576 = vsub.f32 %v482, %v560
    %v577 = vsub.f32 %v485, %v561
    %v578 = vsub.f32 %v490, %v562
    %v579 = vsub.f32 %v493, %v563
    %v580 = vsub.f32 %v498, %v564
    %v581 = vsub.f32 %v501, %v565
    %v582 = vsub.f32 %v506, %v566
    %v583 = vsub.f32 %v509, %v567
    %v584 = vsub.f32 %v514, %v568
    %v585 = vsub.f32 %v517, %v569
    %v586 = vmul.f32 %v570, %v118
    %v587 = vmul.f32 %v571, %v118
    %v588 = vmul.f32 %v572, %v118
    %v589 = vmul.f32 %v573, %v118
    %v590 = vmul.f32 %v574, %v118
    %v591 = vmul.f32 %v575, %v118
    %v592 = vmul.f32 %v576, %v118
    %v593 = vmul.f32 %v577, %v118
    %v594 = vmul.f32 %v578, %v118
    %v595 = vmul.f32 %v579, %v118
    %v596 = vmul.f32 %v580, %v118
    %v597 = vmul.f32 %v581, %v118
    %v598 = vmul.f32 %v582, %v118
    %v599 = vmul.f32 %v583, %v118
    %v600 = vmul.f32 %v584, %v118
    %v601 = vmul.f32 %v585, %v118
    %v602 = vmul.f32 %v586, %v586
    %v603 = vmul.f32 %v587, %v587
    %v604 = vmul.f32 %v588, %v588
    %v605 = vmul.f32 %v589, %v589
    %v606 = vmul.f32 %v590, %v590
    %v607 = vmul.f32 %v591, %v591
    %v608 = vmul.f32 %v592, %v592
    %v609 = vmul.f32 %v593, %v593
    %v610 = vmul.f32 %v594, %v594
    %v611 = vmul.f32 %v595, %v595
    %v612 = vmul.f32 %v596, %v596
    %v613 = vmul.f32 %v597, %v597
    %v614 = vmul.f32 %v598, %v598
    %v615 = vmul.f32 %v599, %v599
    %v616 = vmul.f32 %v600, %v600
    %v617 = vmul.f32 %v601, %v601
    %618 = vadd.xlane.f32.xlu0 %v602
    %v619 = vpop.xlane.xlu0 %618
    %620 = vadd.xlane.f32.xlu0 %v603
    %v621 = vpop.xlane.xlu0 %620
    %622 = vadd.xlane.f32.xlu0 %v604
    %v623 = vpop.xlane.xlu0 %622
    %624 = vadd.xlane.f32.xlu0 %v605
    %v625 = vpop.xlane.xlu0 %624
    %626 = vadd.xlane.f32.xlu0 %v606
    %v627 = vpop.xlane.xlu0 %626
    %628 = vadd.xlane.f32.xlu0 %v607
    %v629 = vpop.xlane.xlu0 %628
    %630 = vadd.xlane.f32.xlu0 %v608
    %v631 = vpop.xlane.xlu0 %630
    %632 = vadd.xlane.f32.xlu0 %v609
    %v633 = vpop.xlane.xlu0 %632
    %634 = vadd.xlane.f32.xlu0 %v610
    %v635 = vpop.xlane.xlu0 %634
    %636 = vadd.xlane.f32.xlu0 %v611
    %v637 = vpop.xlane.xlu0 %636
    %638 = vadd.xlane.f32.xlu0 %v612
    %v639 = vpop.xlane.xlu0 %638
    %640 = vadd.xlane.f32.xlu0 %v613
    %v641 = vpop.xlane.xlu0 %640
    %642 = vadd.xlane.f32.xlu0 %v614
    %v643 = vpop.xlane.xlu0 %642
    %644 = vadd.xlane.f32.xlu0 %v615
    %v645 = vpop.xlane.xlu0 %644
    %646 = vadd.xlane.f32.xlu0 %v616
    %v647 = vpop.xlane.xlu0 %646
    %648 = vadd.xlane.f32.xlu0 %v617
    %v649 = vpop.xlane.xlu0 %648
    %v650 = vmul.f32 %v619, 0.03125
    %v651 = vmul.f32 %v621, 0.03125
    %v652 = vmul.f32 %v623, 0.03125
    %v653 = vmul.f32 %v625, 0.03125
    %v654 = vmul.f32 %v627, 0.03125
    %v655 = vmul.f32 %v629, 0.03125
    %v656 = vmul.f32 %v631, 0.03125
    %v657 = vmul.f32 %v633, 0.03125
    %v658 = vmul.f32 %v635, 0.03125
    %v659 = vmul.f32 %v637, 0.03125
    %v660 = vmul.f32 %v639, 0.03125
    %v661 = vmul.f32 %v641, 0.03125
    %v662 = vmul.f32 %v643, 0.03125
    %v663 = vmul.f32 %v645, 0.03125
    %v664 = vmul.f32 %v647, 0.03125
    %v665 = vmul.f32 %v649, 0.03125
    %v666 = vadd.f32 %v650, 1e-05
    %v667 = vadd.f32 %v651, 1e-05
    %v668 = vadd.f32 %v652, 1e-05
    %v669 = vadd.f32 %v653, 1e-05
    %v670 = vadd.f32 %v654, 1e-05
    %v671 = vadd.f32 %v655, 1e-05
    %v672 = vadd.f32 %v656, 1e-05
    %v673 = vadd.f32 %v657, 1e-05
    %v674 = vadd.f32 %v658, 1e-05
    %v675 = vadd.f32 %v659, 1e-05
    %v676 = vadd.f32 %v660, 1e-05
    %v677 = vadd.f32 %v661, 1e-05
    %v678 = vadd.f32 %v662, 1e-05
    %v679 = vadd.f32 %v663, 1e-05
    %v680 = vadd.f32 %v664, 1e-05
    %v681 = vadd.f32 %v665, 1e-05
    %v682 = vrsqrt.pop %v666
    %v683 = vrsqrt.pop %v667
    %v684 = vrsqrt.pop %v668
    %v685 = vrsqrt.pop %v669
    %v686 = vrsqrt.pop %v670
    %v687 = vrsqrt.pop %v671
    %v688 = vrsqrt.pop %v672
    %v689 = vrsqrt.pop %v673
    %v690 = vrsqrt.pop %v674
    %v691 = vrsqrt.pop %v675
    %v692 = vrsqrt.pop %v676
    %v693 = vrsqrt.pop %v677
    %v694 = vrsqrt.pop %v678
    %v695 = vrsqrt.pop %v679
    %v696 = vrsqrt.pop %v680
    %v697 = vrsqrt.pop %v681
    %v698 = vmul.f32 %v586, %v682
    %v699 = vmul.f32 %v587, %v683
    %v700 = vmul.f32 %v588, %v684
    %v701 = vmul.f32 %v589, %v685
    %v702 = vmul.f32 %v590, %v686
    %v703 = vmul.f32 %v591, %v687
    %v704 = vmul.f32 %v592, %v688
    %v705 = vmul.f32 %v593, %v689
    %v706 = vmul.f32 %v594, %v690
    %v707 = vmul.f32 %v595, %v691
    %v708 = vmul.f32 %v596, %v692
    %v709 = vmul.f32 %v597, %v693
    %v710 = vmul.f32 %v598, %v694
    %v711 = vmul.f32 %v599, %v695
    %v712 = vmul.f32 %v600, %v696
    %v713 = vmul.f32 %v601, %v697
    %v715 = vlaneseq
    %v716 = vshrl.u32 %v715, 7
    %v717 = vsub.s32 0, %v716
    %v718 = vrot.slane %v520, %v717
    %v720 = vmul.f32 %v698, %v718
    %v721 = vmul.f32 %v699, %v718
    %v722 = vmul.f32 %v700, %v718
    %v723 = vmul.f32 %v701, %v718
    %v724 = vmul.f32 %v702, %v718
    %v725 = vmul.f32 %v703, %v718
    %v726 = vmul.f32 %v704, %v718
    %v727 = vmul.f32 %v705, %v718
    %v728 = vmul.f32 %v706, %v718
    %v729 = vmul.f32 %v707, %v718
    %v730 = vmul.f32 %v708, %v718
    %v731 = vmul.f32 %v709, %v718
    %v732 = vmul.f32 %v710, %v718
    %v733 = vmul.f32 %v711, %v718
    %v734 = vmul.f32 %v712, %v718
    %v735 = vmul.f32 %v713, %v718
    %v737 = vlaneseq
    %v738 = vshrl.u32 %v737, 7
    %v739 = vsub.s32 0, %v738
    %v740 = vrot.slane %v521, %v739
    %v742 = vadd.f32 %v720, %v740
    %v743 = vadd.f32 %v721, %v740
    %v744 = vadd.f32 %v722, %v740
    %v745 = vadd.f32 %v723, %v740
    %v746 = vadd.f32 %v724, %v740
    %v747 = vadd.f32 %v725, %v740
    %v748 = vadd.f32 %v726, %v740
    %v749 = vadd.f32 %v727, %v740
    %v750 = vadd.f32 %v728, %v740
    %v751 = vadd.f32 %v729, %v740
    %v752 = vadd.f32 %v730, %v740
    %v753 = vadd.f32 %v731, %v740
    %v754 = vadd.f32 %v732, %v740
    %v755 = vadd.f32 %v733, %v740
    %v756 = vadd.f32 %v734, %v740
    %v757 = vadd.f32 %v735, %v740
    %v758 = vmax.f32 %v742, 0.0
    %v759 = vmax.f32 %v743, 0.0
    %v760 = vmax.f32 %v744, 0.0
    %v761 = vmax.f32 %v745, 0.0
    %v762 = vmax.f32 %v746, 0.0
    %v763 = vmax.f32 %v747, 0.0
    %v764 = vmax.f32 %v748, 0.0
    %v765 = vmax.f32 %v749, 0.0
    %v766 = vmax.f32 %v750, 0.0
    %v767 = vmax.f32 %v751, 0.0
    %v768 = vmax.f32 %v752, 0.0
    %v769 = vmax.f32 %v753, 0.0
    %v770 = vmax.f32 %v754, 0.0
    %v771 = vmax.f32 %v755, 0.0
    %v772 = vmax.f32 %v756, 0.0
    %v773 = vmax.f32 %v757, 0.0
    %v774 = vpack.c.bf16 %v759, %v758
    %v775 = vpack.c.bf16 %v761, %v760
    %v776 = vpack.c.bf16 %v763, %v762
    %v777 = vpack.c.bf16 %v765, %v764
    %v778 = vpack.c.bf16 %v767, %v766
    %v779 = vpack.c.bf16 %v769, %v768
    %v780 = vpack.c.bf16 %v771, %v770
    %v781 = vpack.c.bf16 %v773, %v772
    %s782 = scalar_lea.vmem [#allocation7], 64
    %v783 = vld [vmem:[%s782] sm:$0xf]
    %v784 = vld [vmem:[%s782 + $0x4] sm:$0xf]
    %v785 = vld [vmem:[%s782 + $0x8] sm:$0xf]
    %v786 = vld [vmem:[%s782 + $0xc] sm:$0xf]
    %v787 = vld [vmem:[%s782 + $0x10] sm:$0xf]
    %v788 = vld [vmem:[%s782 + $0x14] sm:$0xf]
    %v789 = vld [vmem:[%s782 + $0x18] sm:$0xf]
    %v790 = vld [vmem:[%s782 + $0x1c] sm:$0xf]
    %v791 = vld [vmem:[%s782 + $0x20] sm:$0xf]
    %v792 = vld [vmem:[%s782 + $0x24] sm:$0xf]
    %v793 = vld [vmem:[%s782 + $0x28] sm:$0xf]
    %v794 = vld [vmem:[%s782 + $0x2c] sm:$0xf]
    %v795 = vld [vmem:[%s782 + $0x30] sm:$0xf]
    %v796 = vld [vmem:[%s782 + $0x34] sm:$0xf]
    %v797 = vld [vmem:[%s782 + $0x38] sm:$0xf]
    %v798 = vld [vmem:[%s782 + $0x3c] sm:$0xf]
    %v815 = vunpack.c.l.b16 %v783
    %v816 = vunpack.c.l.b16 %v784
    %v817 = vunpack.c.l.b16 %v785
    %v818 = vunpack.c.l.b16 %v786
    %v819 = vunpack.c.l.b16 %v787
    %v820 = vunpack.c.l.b16 %v788
    %v821 = vunpack.c.l.b16 %v789
    %v822 = vunpack.c.l.b16 %v790
    %v823 = vunpack.c.l.b16 %v791
    %v824 = vunpack.c.l.b16 %v792
    %v825 = vunpack.c.l.b16 %v793
    %v826 = vunpack.c.l.b16 %v794
    %v827 = vunpack.c.l.b16 %v795
    %v828 = vunpack.c.l.b16 %v796
    %v829 = vunpack.c.l.b16 %v797
    %v830 = vunpack.c.l.b16 %v798
    %v831 = vpack.c.b16 %v816, %v815
    %v832 = vpack.c.b16 %v818, %v817
    %v833 = vpack.c.b16 %v820, %v819
    %v834 = vpack.c.b16 %v822, %v821
    %v835 = vpack.c.b16 %v824, %v823
    %v836 = vpack.c.b16 %v826, %v825
    %v837 = vpack.c.b16 %v828, %v827
    %v838 = vpack.c.b16 %v830, %v829
    %847 = vmatprep.subr.bf16.mxu0 0
    %848 = vmatpush1.bf16.msra.mxu0 %v831
    %849 = vmatprep.subr.bf16.mxu0 0
    %850 = vmatpush1.bf16.msra.mxu0 %v832
    %851 = vmatprep.subr.bf16.mxu0 0
    %852 = vmatpush1.bf16.msra.mxu0 %v833
    %853 = vmatprep.subr.bf16.mxu0 0
    %854 = vmatpush1.bf16.msra.mxu0 %v834
    %855 = vmatprep.subr.bf16.mxu0 0
    %856 = vmatpush1.bf16.msra.mxu0 %v835
    %857 = vmatprep.subr.bf16.mxu0 0
    %858 = vmatpush1.bf16.msra.mxu0 %v836
    %859 = vmatprep.subr.bf16.mxu0 0
    %860 = vmatpush1.bf16.msra.mxu0 %v837
    %861 = vmatprep.subr.bf16.mxu0 0
    %862 = vmatpush1.bf16.msra.mxu0 %v838
    %863 = vmatprep.subr.bf16.mxu0 0
    %864 = vmatpush1.bf16.msra.mxu0 0
    %865 = vmatprep.subr.bf16.mxu0 0
    %866 = vmatpush1.bf16.msra.mxu0 0
    %867 = vmatprep.subr.bf16.mxu0 0
    %868 = vmatpush1.bf16.msra.mxu0 0
    %869 = vmatprep.subr.bf16.mxu0 0
    %870 = vmatpush1.bf16.msra.mxu0 0
    %871 = vmatprep.subr.bf16.mxu0 0
    %872 = vmatpush1.bf16.msra.mxu0 0
    %873 = vmatprep.subr.bf16.mxu0 0
    %874 = vmatpush1.bf16.msra.mxu0 0
    %875 = vmatprep.subr.bf16.mxu0 0
    %876 = vmatpush1.bf16.msra.mxu0 0
    %877 = vmatprep.subr.bf16.mxu0 0
    %878 = vmatpush1.bf16.msra.mxu0 0
    %879 = vmatprep.mubr.bf16.mxu0 0
    %880 = vmatmul.mubr.bf16.gmra.mrb[0].mxu0 %v774
    %v881 = vpop.f32.mrb[0].mxu0
    %v882 = vadd.f32 0.0, %v881
    %v883 = vpop.f32.mrb[0].mxu0
    %v884 = vpop.f32.mrb[0].mxu0
    %v885 = vadd.f32 0.0, %v884
    %v886 = vpop.f32.mrb[0].mxu0
    %887 = vmatprep.mubr.bf16.mxu0 0
    %888 = vmatmul.mubr.bf16.gmra.mrb[0].mxu0 %v775
    %v889 = vpop.f32.mrb[0].mxu0
    %v890 = vadd.f32 0.0, %v889
    %v891 = vpop.f32.mrb[0].mxu0
    %v892 = vpop.f32.mrb[0].mxu0
    %v893 = vadd.f32 0.0, %v892
    %v894 = vpop.f32.mrb[0].mxu0
    %895 = vmatprep.mubr.bf16.mxu0 0
    %896 = vmatmul.mubr.bf16.gmra.mrb[0].mxu0 %v776
    %v897 = vpop.f32.mrb[0].mxu0
    %v898 = vadd.f32 0.0, %v897
    %v899 = vpop.f32.mrb[0].mxu0
    %v900 = vpop.f32.mrb[0].mxu0
    %v901 = vadd.f32 0.0, %v900
    %v902 = vpop.f32.mrb[0].mxu0
    %903 = vmatprep.mubr.bf16.mxu0 0
    %904 = vmatmul.mubr.bf16.gmra.mrb[0].mxu0 %v777
    %v905 = vpop.f32.mrb[0].mxu0
    %v906 = vadd.f32 0.0, %v905
    %v907 = vpop.f32.mrb[0].mxu0
    %v908 = vpop.f32.mrb[0].mxu0
    %v909 = vadd.f32 0.0, %v908
    %v910 = vpop.f32.mrb[0].mxu0
    %911 = vmatprep.mubr.bf16.mxu0 0
    %912 = vmatmul.mubr.bf16.gmra.mrb[0].mxu0 %v778
    %v913 = vpop.f32.mrb[0].mxu0
    %v914 = vadd.f32 0.0, %v913
    %v915 = vpop.f32.mrb[0].mxu0
    %v916 = vpop.f32.mrb[0].mxu0
    %v917 = vadd.f32 0.0, %v916
    %v918 = vpop.f32.mrb[0].mxu0
    %919 = vmatprep.mubr.bf16.mxu0 0
    %920 = vmatmul.mubr.bf16.gmra.mrb[0].mxu0 %v779
    %v921 = vpop.f32.mrb[0].mxu0
    %v922 = vadd.f32 0.0, %v921
    %v923 = vpop.f32.mrb[0].mxu0
    %v924 = vpop.f32.mrb[0].mxu0
    %v925 = vadd.f32 0.0, %v924
    %v926 = vpop.f32.mrb[0].mxu0
    %927 = vmatprep.mubr.bf16.mxu0 0
    %928 = vmatmul.mubr.bf16.gmra.mrb[0].mxu0 %v780
    %v929 = vpop.f32.mrb[0].mxu0
    %v930 = vadd.f32 0.0, %v929
    %v931 = vpop.f32.mrb[0].mxu0
    %v932 = vpop.f32.mrb[0].mxu0
    %v933 = vadd.f32 0.0, %v932
    %v934 = vpop.f32.mrb[0].mxu0
    %935 = vmatprep.mubr.bf16.mxu0 0
    %936 = vmatmul.mubr.bf16.gmra.mrb[0].mxu0 %v781
    %v937 = vpop.f32.mrb[0].mxu0
    %v938 = vadd.f32 0.0, %v937
    %v939 = vpop.f32.mrb[0].mxu0
    %v940 = vpop.f32.mrb[0].mxu0
    %v941 = vadd.f32 0.0, %v940
    %v942 = vpop.f32.mrb[0].mxu0
    %943 = vdwg.mxu0
    %v944 = vpack.c.bf16 %v885, %v882
    %v945 = vpack.c.bf16 %v893, %v890
    %v946 = vpack.c.bf16 %v901, %v898
    %v947 = vpack.c.bf16 %v909, %v906
    %v948 = vpack.c.bf16 %v917, %v914
    %v949 = vpack.c.bf16 %v925, %v922
    %v950 = vpack.c.bf16 %v933, %v930
    %v951 = vpack.c.bf16 %v941, %v938
    %s952 = scalar_lea.vmem %s4, 1
    %v953 = vld [vmem:[%s952] sm:$0x1]
    %v955 = vlaneseq
    %v956 = vshrl.u32 %v955, 7
    %v957 = vsub.s32 0, %v956
    %v958 = vrot.slane %v953, %v957
    %960 = vmatprep.subr.bf16.mxu0 0
    %961 = vmatpush1.bf16.msra.mxu0 %v944
    %962 = vmatprep.subr.bf16.mxu0 0
    %963 = vmatpush1.bf16.msra.mxu0 %v945
    %964 = vmatprep.subr.bf16.mxu0 0
    %965 = vmatpush1.bf16.msra.mxu0 %v946
    %966 = vmatprep.subr.bf16.mxu0 0
    %967 = vmatpush1.bf16.msra.mxu0 %v947
    %968 = vmatprep.subr.bf16.mxu0 0
    %969 = vmatpush1.bf16.msra.mxu0 %v948
    %970 = vmatprep.subr.bf16.mxu0 0
    %971 = vmatpush1.bf16.msra.mxu0 %v949
    %972 = vmatprep.subr.bf16.mxu0 0
    %973 = vmatpush1.bf16.msra.mxu0 %v950
    %974 = vmatprep.subr.bf16.mxu0 0
    %975 = vmatpush1.bf16.msra.mxu0 %v951
    %976 = vmatprep.subr.bf16.mxu0 0
    %977 = vmatpush1.bf16.msra.mxu0 0
    %978 = vmatprep.subr.bf16.mxu0 0
    %979 = vmatpush1.bf16.msra.mxu0 0
    %980 = vmatprep.subr.bf16.mxu0 0
    %981 = vmatpush1.bf16.msra.mxu0 0
    %982 = vmatprep.subr.bf16.mxu0 0
    %983 = vmatpush1.bf16.msra.mxu0 0
    %984 = vmatprep.subr.bf16.mxu0 0
    %985 = vmatpush1.bf16.msra.mxu0 0
    %986 = vmatprep.subr.bf16.mxu0 0
    %987 = vmatpush1.bf16.msra.mxu0 0
    %988 = vmatprep.subr.bf16.mxu0 0
    %989 = vmatpush1.bf16.msra.mxu0 0
    %990 = vmatprep.subr.bf16.mxu0 0
    %991 = vmatpush1.bf16.msra.mxu0 0
    %992 = vmatprep.mubr.bf16.mxu0 0
    %993 = vmatmul.mubr.bf16.gmra.mrb[0].mxu0 %v407
    %v994 = vpop.f32.mrb[0].mxu0
    %v995 = vadd.f32 %v958, %v994
    %v996 = vpop.f32.mrb[0].mxu0
    %v997 = vpop.f32.mrb[0].mxu0
    %v998 = vadd.f32 %v958, %v997
    %v999 = vpop.f32.mrb[0].mxu0
    %1000 = vmatprep.mubr.bf16.mxu0 0
    %1001 = vmatmul.mubr.bf16.gmra.mrb[0].mxu0 %v408
    %v1002 = vpop.f32.mrb[0].mxu0
    %v1003 = vadd.f32 %v958, %v1002
    %v1004 = vpop.f32.mrb[0].mxu0
    %v1005 = vpop.f32.mrb[0].mxu0
    %v1006 = vadd.f32 %v958, %v1005
    %v1007 = vpop.f32.mrb[0].mxu0
    %1008 = vmatprep.mubr.bf16.mxu0 0
    %1009 = vmatmul.mubr.bf16.gmra.mrb[0].mxu0 %v409
    %v1010 = vpop.f32.mrb[0].mxu0
    %v1011 = vadd.f32 %v958, %v1010
    %v1012 = vpop.f32.mrb[0].mxu0
    %v1013 = vpop.f32.mrb[0].mxu0
    %v1014 = vadd.f32 %v958, %v1013
    %v1015 = vpop.f32.mrb[0].mxu0
    %1016 = vmatprep.mubr.bf16.mxu0 0
    %1017 = vmatmul.mubr.bf16.gmra.mrb[0].mxu0 %v410
    %v1018 = vpop.f32.mrb[0].mxu0
    %v1019 = vadd.f32 %v958, %v1018
    %v1020 = vpop.f32.mrb[0].mxu0
    %v1021 = vpop.f32.mrb[0].mxu0
    %v1022 = vadd.f32 %v958, %v1021
    %v1023 = vpop.f32.mrb[0].mxu0
    %1024 = vmatprep.mubr.bf16.mxu0 0
    %1025 = vmatmul.mubr.bf16.gmra.mrb[0].mxu0 %v411
    %v1026 = vpop.f32.mrb[0].mxu0
    %v1027 = vadd.f32 %v958, %v1026
    %v1028 = vpop.f32.mrb[0].mxu0
    %v1029 = vpop.f32.mrb[0].mxu0
    %v1030 = vadd.f32 %v958, %v1029
    %v1031 = vpop.f32.mrb[0].mxu0
    %1032 = vmatprep.mubr.bf16.mxu0 0
    %1033 = vmatmul.mubr.bf16.gmra.mrb[0].mxu0 %v412
    %v1034 = vpop.f32.mrb[0].mxu0
    %v1035 = vadd.f32 %v958, %v1034
    %v1036 = vpop.f32.mrb[0].mxu0
    %v1037 = vpop.f32.mrb[0].mxu0
    %v1038 = vadd.f32 %v958, %v1037
    %v1039 = vpop.f32.mrb[0].mxu0
    %1040 = vmatprep.mubr.bf16.mxu0 0
    %1041 = vmatmul.mubr.bf16.gmra.mrb[0].mxu0 %v413
    %v1042 = vpop.f32.mrb[0].mxu0
    %v1043 = vadd.f32 %v958, %v1042
    %v1044 = vpop.f32.mrb[0].mxu0
    %v1045 = vpop.f32.mrb[0].mxu0
    %v1046 = vadd.f32 %v958, %v1045
    %v1047 = vpop.f32.mrb[0].mxu0
    %1048 = vmatprep.mubr.bf16.mxu0 0
    %1049 = vmatmul.mubr.bf16.gmra.mrb[0].mxu0 %v414
    %v1050 = vpop.f32.mrb[0].mxu0
    %v1051 = vadd.f32 %v958, %v1050
    %v1052 = vpop.f32.mrb[0].mxu0
    %v1053 = vpop.f32.mrb[0].mxu0
    %v1054 = vadd.f32 %v958, %v1053
    %v1055 = vpop.f32.mrb[0].mxu0
    %1056 = vdwg.mxu0
    %s1057 = scalar_lea.vmem %s5, 1
    %v1058 = vld [vmem:[%s1057] sm:$0x1]
    %s1059 = scalar_lea.vmem %s6, 1
    %v1060 = vld [vmem:[%s1059] sm:$0x1]
    %1061 = vadd.xlane.f32.xlu0 %v995
    %v1062 = vpop.xlane.xlu0 %1061
    %1063 = vadd.xlane.f32.xlu0 %v998
    %v1064 = vpop.xlane.xlu0 %1063
    %1065 = vadd.xlane.f32.xlu0 %v1003
    %v1066 = vpop.xlane.xlu0 %1065
    %1067 = vadd.xlane.f32.xlu0 %v1006
    %v1068 = vpop.xlane.xlu0 %1067
    %1069 = vadd.xlane.f32.xlu0 %v1011
    %v1070 = vpop.xlane.xlu0 %1069
    %1071 = vadd.xlane.f32.xlu0 %v1014
    %v1072 = vpop.xlane.xlu0 %1071
    %1073 = vadd.xlane.f32.xlu0 %v1019
    %v1074 = vpop.xlane.xlu0 %1073
    %1075 = vadd.xlane.f32.xlu0 %v1022
    %v1076 = vpop.xlane.xlu0 %1075
    %1077 = vadd.xlane.f32.xlu0 %v1027
    %v1078 = vpop.xlane.xlu0 %1077
    %1079 = vadd.xlane.f32.xlu0 %v1030
    %v1080 = vpop.xlane.xlu0 %1079
    %1081 = vadd.xlane.f32.xlu0 %v1035
    %v1082 = vpop.xlane.xlu0 %1081
    %1083 = vadd.xlane.f32.xlu0 %v1038
    %v1084 = vpop.xlane.xlu0 %1083
    %1085 = vadd.xlane.f32.xlu0 %v1043
    %v1086 = vpop.xlane.xlu0 %1085
    %1087 = vadd.xlane.f32.xlu0 %v1046
    %v1088 = vpop.xlane.xlu0 %1087
    %1089 = vadd.xlane.f32.xlu0 %v1051
    %v1090 = vpop.xlane.xlu0 %1089
    %1091 = vadd.xlane.f32.xlu0 %v1054
    %v1092 = vpop.xlane.xlu0 %1091
    %v1093 = vmul.f32 %v1062, 0.03125
    %v1094 = vmul.f32 %v1064, 0.03125
    %v1095 = vmul.f32 %v1066, 0.03125
    %v1096 = vmul.f32 %v1068, 0.03125
    %v1097 = vmul.f32 %v1070, 0.03125
    %v1098 = vmul.f32 %v1072, 0.03125
    %v1099 = vmul.f32 %v1074, 0.03125
    %v1100 = vmul.f32 %v1076, 0.03125
    %v1101 = vmul.f32 %v1078, 0.03125
    %v1102 = vmul.f32 %v1080, 0.03125
    %v1103 = vmul.f32 %v1082, 0.03125
    %v1104 = vmul.f32 %v1084, 0.03125
    %v1105 = vmul.f32 %v1086, 0.03125
    %v1106 = vmul.f32 %v1088, 0.03125
    %v1107 = vmul.f32 %v1090, 0.03125
    %v1108 = vmul.f32 %v1092, 0.03125
    %v1109 = vsub.f32 %v995, %v1093
    %v1110 = vsub.f32 %v998, %v1094
    %v1111 = vsub.f32 %v1003, %v1095
    %v1112 = vsub.f32 %v1006, %v1096
    %v1113 = vsub.f32 %v1011, %v1097
    %v1114 = vsub.f32 %v1014, %v1098
    %v1115 = vsub.f32 %v1019, %v1099
    %v1116 = vsub.f32 %v1022, %v1100
    %v1117 = vsub.f32 %v1027, %v1101
    %v1118 = vsub.f32 %v1030, %v1102
    %v1119 = vsub.f32 %v1035, %v1103
    %v1120 = vsub.f32 %v1038, %v1104
    %v1121 = vsub.f32 %v1043, %v1105
    %v1122 = vsub.f32 %v1046, %v1106
    %v1123 = vsub.f32 %v1051, %v1107
    %v1124 = vsub.f32 %v1054, %v1108
    %v1125 = vmul.f32 %v1109, %v118
    %v1126 = vmul.f32 %v1110, %v118
    %v1127 = vmul.f32 %v1111, %v118
    %v1128 = vmul.f32 %v1112, %v118
    %v1129 = vmul.f32 %v1113, %v118
    %v1130 = vmul.f32 %v1114, %v118
    %v1131 = vmul.f32 %v1115, %v118
    %v1132 = vmul.f32 %v1116, %v118
    %v1133 = vmul.f32 %v1117, %v118
    %v1134 = vmul.f32 %v1118, %v118
    %v1135 = vmul.f32 %v1119, %v118
    %v1136 = vmul.f32 %v1120, %v118
    %v1137 = vmul.f32 %v1121, %v118
    %v1138 = vmul.f32 %v1122, %v118
    %v1139 = vmul.f32 %v1123, %v118
    %v1140 = vmul.f32 %v1124, %v118
    %v1141 = vmul.f32 %v1125, %v1125
    %v1142 = vmul.f32 %v1126, %v1126
    %v1143 = vmul.f32 %v1127, %v1127
    %v1144 = vmul.f32 %v1128, %v1128
    %v1145 = vmul.f32 %v1129, %v1129
    %v1146 = vmul.f32 %v1130, %v1130
    %v1147 = vmul.f32 %v1131, %v1131
    %v1148 = vmul.f32 %v1132, %v1132
    %v1149 = vmul.f32 %v1133, %v1133
    %v1150 = vmul.f32 %v1134, %v1134
    %v1151 = vmul.f32 %v1135, %v1135
    %v1152 = vmul.f32 %v1136, %v1136
    %v1153 = vmul.f32 %v1137, %v1137
    %v1154 = vmul.f32 %v1138, %v1138
    %v1155 = vmul.f32 %v1139, %v1139
    %v1156 = vmul.f32 %v1140, %v1140
    %1157 = vadd.xlane.f32.xlu0 %v1141
    %v1158 = vpop.xlane.xlu0 %1157
    %1159 = vadd.xlane.f32.xlu0 %v1142
    %v1160 = vpop.xlane.xlu0 %1159
    %1161 = vadd.xlane.f32.xlu0 %v1143
    %v1162 = vpop.xlane.xlu0 %1161
    %1163 = vadd.xlane.f32.xlu0 %v1144
    %v1164 = vpop.xlane.xlu0 %1163
    %1165 = vadd.xlane.f32.xlu0 %v1145
    %v1166 = vpop.xlane.xlu0 %1165
    %1167 = vadd.xlane.f32.xlu0 %v1146
    %v1168 = vpop.xlane.xlu0 %1167
    %1169 = vadd.xlane.f32.xlu0 %v1147
    %v1170 = vpop.xlane.xlu0 %1169
    %1171 = vadd.xlane.f32.xlu0 %v1148
    %v1172 = vpop.xlane.xlu0 %1171
    %1173 = vadd.xlane.f32.xlu0 %v1149
    %v1174 = vpop.xlane.xlu0 %1173
    %1175 = vadd.xlane.f32.xlu0 %v1150
    %v1176 = vpop.xlane.xlu0 %1175
    %1177 = vadd.xlane.f32.xlu0 %v1151
    %v1178 = vpop.xlane.xlu0 %1177
    %1179 = vadd.xlane.f32.xlu0 %v1152
    %v1180 = vpop.xlane.xlu0 %1179
    %1181 = vadd.xlane.f32.xlu0 %v1153
    %v1182 = vpop.xlane.xlu0 %1181
    %1183 = vadd.xlane.f32.xlu0 %v1154
    %v1184 = vpop.xlane.xlu0 %1183
    %1185 = vadd.xlane.f32.xlu0 %v1155
    %v1186 = vpop.xlane.xlu0 %1185
    %1187 = vadd.xlane.f32.xlu0 %v1156
    %v1188 = vpop.xlane.xlu0 %1187
    %v1189 = vmul.f32 %v1158, 0.03125
    %v1190 = vmul.f32 %v1160, 0.03125
    %v1191 = vmul.f32 %v1162, 0.03125
    %v1192 = vmul.f32 %v1164, 0.03125
    %v1193 = vmul.f32 %v1166, 0.03125
    %v1194 = vmul.f32 %v1168, 0.03125
    %v1195 = vmul.f32 %v1170, 0.03125
    %v1196 = vmul.f32 %v1172, 0.03125
    %v1197 = vmul.f32 %v1174, 0.03125
    %v1198 = vmul.f32 %v1176, 0.03125
    %v1199 = vmul.f32 %v1178, 0.03125
    %v1200 = vmul.f32 %v1180, 0.03125
    %v1201 = vmul.f32 %v1182, 0.03125
    %v1202 = vmul.f32 %v1184, 0.03125
    %v1203 = vmul.f32 %v1186, 0.03125
    %v1204 = vmul.f32 %v1188, 0.03125
    %v1205 = vadd.f32 %v1189, 1e-05
    %v1206 = vadd.f32 %v1190, 1e-05
    %v1207 = vadd.f32 %v1191, 1e-05
    %v1208 = vadd.f32 %v1192, 1e-05
    %v1209 = vadd.f32 %v1193, 1e-05
    %v1210 = vadd.f32 %v1194, 1e-05
    %v1211 = vadd.f32 %v1195, 1e-05
    %v1212 = vadd.f32 %v1196, 1e-05
    %v1213 = vadd.f32 %v1197, 1e-05
    %v1214 = vadd.f32 %v1198, 1e-05
    %v1215 = vadd.f32 %v1199, 1e-05
    %v1216 = vadd.f32 %v1200, 1e-05
    %v1217 = vadd.f32 %v1201, 1e-05
    %v1218 = vadd.f32 %v1202, 1e-05
    %v1219 = vadd.f32 %v1203, 1e-05
    %v1220 = vadd.f32 %v1204, 1e-05
    %v1221 = vrsqrt.pop %v1205
    %v1222 = vrsqrt.pop %v1206
    %v1223 = vrsqrt.pop %v1207
    %v1224 = vrsqrt.pop %v1208
    %v1225 = vrsqrt.pop %v1209
    %v1226 = vrsqrt.pop %v1210
    %v1227 = vrsqrt.pop %v1211
    %v1228 = vrsqrt.pop %v1212
    %v1229 = vrsqrt.pop %v1213
    %v1230 = vrsqrt.pop %v1214
    %v1231 = vrsqrt.pop %v1215
    %v1232 = vrsqrt.pop %v1216
    %v1233 = vrsqrt.pop %v1217
    %v1234 = vrsqrt.pop %v1218
    %v1235 = vrsqrt.pop %v1219
    %v1236 = vrsqrt.pop %v1220
    %v1237 = vmul.f32 %v1125, %v1221
    %v1238 = vmul.f32 %v1126, %v1222
    %v1239 = vmul.f32 %v1127, %v1223
    %v1240 = vmul.f32 %v1128, %v1224
    %v1241 = vmul.f32 %v1129, %v1225
    %v1242 = vmul.f32 %v1130, %v1226
    %v1243 = vmul.f32 %v1131, %v1227
    %v1244 = vmul.f32 %v1132, %v1228
    %v1245 = vmul.f32 %v1133, %v1229
    %v1246 = vmul.f32 %v1134, %v1230
    %v1247 = vmul.f32 %v1135, %v1231
    %v1248 = vmul.f32 %v1136, %v1232
    %v1249 = vmul.f32 %v1137, %v1233
    %v1250 = vmul.f32 %v1138, %v1234
    %v1251 = vmul.f32 %v1139, %v1235
    %v1252 = vmul.f32 %v1140, %v1236
    %v1254 = vlaneseq
    %v1255 = vshrl.u32 %v1254, 7
    %v1256 = vsub.s32 0, %v1255
    %v1257 = vrot.slane %v1058, %v1256
    %v1259 = vmul.f32 %v1237, %v1257
    %v1260 = vmul.f32 %v1238, %v1257
    %v1261 = vmul.f32 %v1239, %v1257
    %v1262 = vmul.f32 %v1240, %v1257
    %v1263 = vmul.f32 %v1241, %v1257
    %v1264 = vmul.f32 %v1242, %v1257
    %v1265 = vmul.f32 %v1243, %v1257
    %v1266 = vmul.f32 %v1244, %v1257
    %v1267 = vmul.f32 %v1245, %v1257
    %v1268 = vmul.f32 %v1246, %v1257
    %v1269 = vmul.f32 %v1247, %v1257
    %v1270 = vmul.f32 %v1248, %v1257
    %v1271 = vmul.f32 %v1249, %v1257
    %v1272 = vmul.f32 %v1250, %v1257
    %v1273 = vmul.f32 %v1251, %v1257
    %v1274 = vmul.f32 %v1252, %v1257
    %v1276 = vlaneseq
    %v1277 = vshrl.u32 %v1276, 7
    %v1278 = vsub.s32 0, %v1277
    %v1279 = vrot.slane %v1060, %v1278
    %v1281 = vadd.f32 %v1259, %v1279
    %v1282 = vadd.f32 %v1260, %v1279
    %v1283 = vadd.f32 %v1261, %v1279
    %v1284 = vadd.f32 %v1262, %v1279
    %v1285 = vadd.f32 %v1263, %v1279
    %v1286 = vadd.f32 %v1264, %v1279
    %v1287 = vadd.f32 %v1265, %v1279
    %v1288 = vadd.f32 %v1266, %v1279
    %v1289 = vadd.f32 %v1267, %v1279
    %v1290 = vadd.f32 %v1268, %v1279
    %v1291 = vadd.f32 %v1269, %v1279
    %v1292 = vadd.f32 %v1270, %v1279
    %v1293 = vadd.f32 %v1271, %v1279
    %v1294 = vadd.f32 %v1272, %v1279
    %v1295 = vadd.f32 %v1273, %v1279
    %v1296 = vadd.f32 %v1274, %v1279
    %v1297 = vmax.f32 %v1281, 0.0
    %v1298 = vmax.f32 %v1282, 0.0
    %v1299 = vmax.f32 %v1283, 0.0
    %v1300 = vmax.f32 %v1284, 0.0
    %v1301 = vmax.f32 %v1285, 0.0
    %v1302 = vmax.f32 %v1286, 0.0
    %v1303 = vmax.f32 %v1287, 0.0
    %v1304 = vmax.f32 %v1288, 0.0
    %v1305 = vmax.f32 %v1289, 0.0
    %v1306 = vmax.f32 %v1290, 0.0
    %v1307 = vmax.f32 %v1291, 0.0
    %v1308 = vmax.f32 %v1292, 0.0
    %v1309 = vmax.f32 %v1293, 0.0
    %v1310 = vmax.f32 %v1294, 0.0
    %v1311 = vmax.f32 %v1295, 0.0
    %v1312 = vmax.f32 %v1296, 0.0
    %v1313 = vpack.c.bf16 %v1298, %v1297
    %v1314 = vpack.c.bf16 %v1300, %v1299
    %v1315 = vpack.c.bf16 %v1302, %v1301
    %v1316 = vpack.c.bf16 %v1304, %v1303
    %v1317 = vpack.c.bf16 %v1306, %v1305
    %v1318 = vpack.c.bf16 %v1308, %v1307
    %v1319 = vpack.c.bf16 %v1310, %v1309
    %v1320 = vpack.c.bf16 %v1312, %v1311
    %v1321 = vld [vmem:[%s2] sm:$0xf]
    %1322 = vmatprep.subr.bf16.mxu0 0
    %1323 = vmatpush1.bf16.msra.mxu0 %v1313
    %1324 = vmatprep.subr.bf16.mxu0 0
    %1325 = vmatpush1.bf16.msra.mxu0 %v1314
    %1326 = vmatprep.subr.bf16.mxu0 0
    %1327 = vmatpush1.bf16.msra.mxu0 %v1315
    %1328 = vmatprep.subr.bf16.mxu0 0
    %1329 = vmatpush1.bf16.msra.mxu0 %v1316
    %1330 = vmatprep.subr.bf16.mxu0 0
    %1331 = vmatpush1.bf16.msra.mxu0 %v1317
    %1332 = vmatprep.subr.bf16.mxu0 0
    %1333 = vmatpush1.bf16.msra.mxu0 %v1318
    %1334 = vmatprep.subr.bf16.mxu0 0
    %1335 = vmatpush1.bf16.msra.mxu0 %v1319
    %1336 = vmatprep.subr.bf16.mxu0 0
    %1337 = vmatpush1.bf16.msra.mxu0 %v1320
    %1338 = vmatprep.subr.bf16.mxu0 0
    %1339 = vmatpush1.bf16.msra.mxu0 0
    %1340 = vmatprep.subr.bf16.mxu0 0
    %1341 = vmatpush1.bf16.msra.mxu0 0
    %1342 = vmatprep.subr.bf16.mxu0 0
    %1343 = vmatpush1.bf16.msra.mxu0 0
    %1344 = vmatprep.subr.bf16.mxu0 0
    %1345 = vmatpush1.bf16.msra.mxu0 0
    %1346 = vmatprep.subr.bf16.mxu0 0
    %1347 = vmatpush1.bf16.msra.mxu0 0
    %1348 = vmatprep.subr.bf16.mxu0 0
    %1349 = vmatpush1.bf16.msra.mxu0 0
    %1350 = vmatprep.subr.bf16.mxu0 0
    %1351 = vmatpush1.bf16.msra.mxu0 0
    %1352 = vmatprep.subr.bf16.mxu0 0
    %1353 = vmatpush1.bf16.msra.mxu0 0
    %1354 = vmatprep.mubr.bf16.mxu0 0
    %1355 = vmatmul.mubr.bf16.gmra.mrb[0].mxu0 %v1321
    %v1356 = vpop.f32.mrb[0].mxu0
    %v1357 = vadd.f32 0.0, %v1356
    %v1358 = vpop.f32.mrb[0].mxu0
    %v1359 = vpop.f32.mrb[0].mxu0
    %v1360 = vpop.f32.mrb[0].mxu0
    %1361 = vdwg.mxu0
    %v1362 = vpack.c.bf16 %v1357, %v1357
    %v1363 = vld [vmem:[#allocation8] sm:$0xf]
    %v1364 = vld [vmem:[#allocation8 + $0x4] sm:$0xf]
    %v1365 = vld [vmem:[#allocation8 + $0x8] sm:$0xf]
    %v1366 = vld [vmem:[#allocation8 + $0xc] sm:$0xf]
    %v1367 = vld [vmem:[#allocation8 + $0x10] sm:$0xf]
    %v1368 = vld [vmem:[#allocation8 + $0x14] sm:$0xf]
    %v1369 = vld [vmem:[#allocation8 + $0x18] sm:$0xf]
    %v1370 = vld [vmem:[#allocation8 + $0x1c] sm:$0xf]
    %v1371 = vld [vmem:[#allocation8 + $0x20] sm:$0xf]
    %v1372 = vld [vmem:[#allocation8 + $0x24] sm:$0xf]
    %v1373 = vld [vmem:[#allocation8 + $0x28] sm:$0xf]
    %v1374 = vld [vmem:[#allocation8 + $0x2c] sm:$0xf]
    %v1375 = vld [vmem:[#allocation8 + $0x30] sm:$0xf]
    %v1376 = vld [vmem:[#allocation8 + $0x34] sm:$0xf]
    %v1377 = vld [vmem:[#allocation8 + $0x38] sm:$0xf]
    %v1378 = vld [vmem:[#allocation8 + $0x3c] sm:$0xf]
    %v1379 = vld [vmem:[%s8] sm:$0x1]
    %v1381 = vlaneseq
    %v1382 = vshrl.u32 %v1381, 7
    %v1383 = vsub.s32 0, %v1382
    %v1384 = vrot.slane %v1379, %v1383
    %v1402 = vunpack.c.l.b16 %v1363
    %v1403 = vunpack.c.l.b16 %v1364
    %v1404 = vunpack.c.l.b16 %v1365
    %v1405 = vunpack.c.l.b16 %v1366
    %v1406 = vunpack.c.l.b16 %v1367
    %v1407 = vunpack.c.l.b16 %v1368
    %v1408 = vunpack.c.l.b16 %v1369
    %v1409 = vunpack.c.l.b16 %v1370
    %v1410 = vunpack.c.l.b16 %v1371
    %v1411 = vunpack.c.l.b16 %v1372
    %v1412 = vunpack.c.l.b16 %v1373
    %v1413 = vunpack.c.l.b16 %v1374
    %v1414 = vunpack.c.l.b16 %v1375
    %v1415 = vunpack.c.l.b16 %v1376
    %v1416 = vunpack.c.l.b16 %v1377
    %v1417 = vunpack.c.l.b16 %v1378
    %v1418 = vpack.c.b16 %v1403, %v1402
    %v1419 = vpack.c.b16 %v1405, %v1404
    %v1420 = vpack.c.b16 %v1407, %v1406
    %v1421 = vpack.c.b16 %v1409, %v1408
    %v1422 = vpack.c.b16 %v1411, %v1410
    %v1423 = vpack.c.b16 %v1413, %v1412
    %v1424 = vpack.c.b16 %v1415, %v1414
    %v1425 = vpack.c.b16 %v1417, %v1416
    %1434 = vmatprep.subr.bf16.mxu0 0
    %1435 = vmatpush1.bf16.msra.mxu0 %v1418
    %1436 = vmatprep.subr.bf16.mxu0 0
    %1437 = vmatpush1.bf16.msra.mxu0 %v1419
    %1438 = vmatprep.subr.bf16.mxu0 0
    %1439 = vmatpush1.bf16.msra.mxu0 %v1420
    %1440 = vmatprep.subr.bf16.mxu0 0
    %1441 = vmatpush1.bf16.msra.mxu0 %v1421
    %1442 = vmatprep.subr.bf16.mxu0 0
    %1443 = vmatpush1.bf16.msra.mxu0 %v1422
    %1444 = vmatprep.subr.bf16.mxu0 0
    %1445 = vmatpush1.bf16.msra.mxu0 %v1423
    %1446 = vmatprep.subr.bf16.mxu0 0
    %1447 = vmatpush1.bf16.msra.mxu0 %v1424
    %1448 = vmatprep.subr.bf16.mxu0 0
    %1449 = vmatpush1.bf16.msra.mxu0 %v1425
    %1450 = vmatprep.subr.bf16.mxu0 0
    %1451 = vmatpush1.bf16.msra.mxu0 0
    %1452 = vmatprep.subr.bf16.mxu0 0
    %1453 = vmatpush1.bf16.msra.mxu0 0
    %1454 = vmatprep.subr.bf16.mxu0 0
    %1455 = vmatpush1.bf16.msra.mxu0 0
    %1456 = vmatprep.subr.bf16.mxu0 0
    %1457 = vmatpush1.bf16.msra.mxu0 0
    %1458 = vmatprep.subr.bf16.mxu0 0
    %1459 = vmatpush1.bf16.msra.mxu0 0
    %1460 = vmatprep.subr.bf16.mxu0 0
    %1461 = vmatpush1.bf16.msra.mxu0 0
    %1462 = vmatprep.subr.bf16.mxu0 0
    %1463 = vmatpush1.bf16.msra.mxu0 0
    %1464 = vmatprep.subr.bf16.mxu0 0
    %1465 = vmatpush1.bf16.msra.mxu0 0
    %1466 = vmatprep.mubr.bf16.mxu0 0
    %1467 = vmatmul.mubr.bf16.gmra.mrb[0].mxu0 %v1362
    %v1468 = vpop.f32.mrb[0].mxu0
    %v1469 = vadd.f32 %v1384, %v1468
    %v1470 = vpop.f32.mrb[0].mxu0
    %v1471 = vpop.f32.mrb[0].mxu0
    %v1472 = vpop.f32.mrb[0].mxu0
    %1473 = vdwg.mxu0
    %v1474 = vld [vmem:[%s9] sm:$0x1]
    %v1475 = vld [vmem:[%s10] sm:$0x1]
    %1476 = vadd.xlane.f32.xlu0 %v1469
    %v1477 = vpop.xlane.xlu0 %1476
    %v1478 = vmul.f32 %v1477, 0.03125
    %v1479 = vsub.f32 %v1469, %v1478
    %v1480 = vmul.f32 %v1479, %v118
    %v1481 = vmul.f32 %v1480, %v1480
    %1482 = vadd.xlane.f32.xlu0 %v1481
    %v1483 = vpop.xlane.xlu0 %1482
    %v1484 = vmul.f32 %v1483, 0.03125
    %v1485 = vadd.f32 %v1484, 1e-05
    %v1486 = vrsqrt.pop %v1485
    %v1487 = vmul.f32 %v1480, %v1486
    %v1489 = vlaneseq
    %v1490 = vshrl.u32 %v1489, 7
    %v1491 = vsub.s32 0, %v1490
    %v1492 = vrot.slane %v1474, %v1491
    %v1494 = vmul.f32 %v1487, %v1492
    %v1496 = vlaneseq
    %v1497 = vshrl.u32 %v1496, 7
    %v1498 = vsub.s32 0, %v1497
    %v1499 = vrot.slane %v1475, %v1498
    %v1501 = vadd.f32 %v1494, %v1499
    %v1502 = vmax.f32 %v1501, 0.0
    %v1503 = vpack.c.bf16 %v1502, %v1502
    %s1504 = scalar_lea.vmem [#allocation8], 64
    %v1505 = vld [vmem:[%s1504] sm:$0xf]
    %v1506 = vld [vmem:[%s1504 + $0x4] sm:$0xf]
    %v1507 = vld [vmem:[%s1504 + $0x8] sm:$0xf]
    %v1508 = vld [vmem:[%s1504 + $0xc] sm:$0xf]
    %v1509 = vld [vmem:[%s1504 + $0x10] sm:$0xf]
    %v1510 = vld [vmem:[%s1504 + $0x14] sm:$0xf]
    %v1511 = vld [vmem:[%s1504 + $0x18] sm:$0xf]
    %v1512 = vld [vmem:[%s1504 + $0x1c] sm:$0xf]
    %v1513 = vld [vmem:[%s1504 + $0x20] sm:$0xf]
    %v1514 = vld [vmem:[%s1504 + $0x24] sm:$0xf]
    %v1515 = vld [vmem:[%s1504 + $0x28] sm:$0xf]
    %v1516 = vld [vmem:[%s1504 + $0x2c] sm:$0xf]
    %v1517 = vld [vmem:[%s1504 + $0x30] sm:$0xf]
    %v1518 = vld [vmem:[%s1504 + $0x34] sm:$0xf]
    %v1519 = vld [vmem:[%s1504 + $0x38] sm:$0xf]
    %v1520 = vld [vmem:[%s1504 + $0x3c] sm:$0xf]
    %s1521 = scalar_lea.vmem %s8, 1
    %v1522 = vld [vmem:[%s1521] sm:$0x1]
    %v1524 = vlaneseq
    %v1525 = vshrl.u32 %v1524, 7
    %v1526 = vsub.s32 0, %v1525
    %v1527 = vrot.slane %v1522, %v1526
    %v1545 = vunpack.c.l.b16 %v1505
    %v1546 = vunpack.c.l.b16 %v1506
    %v1547 = vunpack.c.l.b16 %v1507
    %v1548 = vunpack.c.l.b16 %v1508
    %v1549 = vunpack.c.l.b16 %v1509
    %v1550 = vunpack.c.l.b16 %v1510
    %v1551 = vunpack.c.l.b16 %v1511
    %v1552 = vunpack.c.l.b16 %v1512
    %v1553 = vunpack.c.l.b16 %v1513
    %v1554 = vunpack.c.l.b16 %v1514
    %v1555 = vunpack.c.l.b16 %v1515
    %v1556 = vunpack.c.l.b16 %v1516
    %v1557 = vunpack.c.l.b16 %v1517
    %v1558 = vunpack.c.l.b16 %v1518
    %v1559 = vunpack.c.l.b16 %v1519
    %v1560 = vunpack.c.l.b16 %v1520
    %v1561 = vpack.c.b16 %v1546, %v1545
    %v1562 = vpack.c.b16 %v1548, %v1547
    %v1563 = vpack.c.b16 %v1550, %v1549
    %v1564 = vpack.c.b16 %v1552, %v1551
    %v1565 = vpack.c.b16 %v1554, %v1553
    %v1566 = vpack.c.b16 %v1556, %v1555
    %v1567 = vpack.c.b16 %v1558, %v1557
    %v1568 = vpack.c.b16 %v1560, %v1559
    %1577 = vmatprep.subr.bf16.mxu0 0
    %1578 = vmatpush1.bf16.msra.mxu0 %v1561
    %1579 = vmatprep.subr.bf16.mxu0 0
    %1580 = vmatpush1.bf16.msra.mxu0 %v1562
    %1581 = vmatprep.subr.bf16.mxu0 0
    %1582 = vmatpush1.bf16.msra.mxu0 %v1563
    %1583 = vmatprep.subr.bf16.mxu0 0
    %1584 = vmatpush1.bf16.msra.mxu0 %v1564
    %1585 = vmatprep.subr.bf16.mxu0 0
    %1586 = vmatpush1.bf16.msra.mxu0 %v1565
    %1587 = vmatprep.subr.bf16.mxu0 0
    %1588 = vmatpush1.bf16.msra.mxu0 %v1566
    %1589 = vmatprep.subr.bf16.mxu0 0
    %1590 = vmatpush1.bf16.msra.mxu0 %v1567
    %1591 = vmatprep.subr.bf16.mxu0 0
    %1592 = vmatpush1.bf16.msra.mxu0 %v1568
    %1593 = vmatprep.subr.bf16.mxu0 0
    %1594 = vmatpush1.bf16.msra.mxu0 0
    %1595 = vmatprep.subr.bf16.mxu0 0
    %1596 = vmatpush1.bf16.msra.mxu0 0
    %1597 = vmatprep.subr.bf16.mxu0 0
    %1598 = vmatpush1.bf16.msra.mxu0 0
    %1599 = vmatprep.subr.bf16.mxu0 0
    %1600 = vmatpush1.bf16.msra.mxu0 0
    %1601 = vmatprep.subr.bf16.mxu0 0
    %1602 = vmatpush1.bf16.msra.mxu0 0
    %1603 = vmatprep.subr.bf16.mxu0 0
    %1604 = vmatpush1.bf16.msra.mxu0 0
    %1605 = vmatprep.subr.bf16.mxu0 0
    %1606 = vmatpush1.bf16.msra.mxu0 0
    %1607 = vmatprep.subr.bf16.mxu0 0
    %1608 = vmatpush1.bf16.msra.mxu0 0
    %1609 = vmatprep.mubr.bf16.mxu0 0
    %1610 = vmatmul.mubr.bf16.gmra.mrb[0].mxu0 %v1503
    %v1611 = vpop.f32.mrb[0].mxu0
    %v1612 = vadd.f32 %v1527, %v1611
    %v1613 = vpop.f32.mrb[0].mxu0
    %v1614 = vpop.f32.mrb[0].mxu0
    %v1615 = vpop.f32.mrb[0].mxu0
    %1616 = vdwg.mxu0
    %s1617 = scalar_lea.vmem %s9, 1
    %v1618 = vld [vmem:[%s1617] sm:$0x1]
    %s1619 = scalar_lea.vmem %s10, 1
    %v1620 = vld [vmem:[%s1619] sm:$0x1]
    %1621 = vadd.xlane.f32.xlu0 %v1612
    %v1622 = vpop.xlane.xlu0 %1621
    %v1623 = vmul.f32 %v1622, 0.03125
    %v1624 = vsub.f32 %v1612, %v1623
    %v1625 = vmul.f32 %v1624, %v118
    %v1626 = vmul.f32 %v1625, %v1625
    %1627 = vadd.xlane.f32.xlu0 %v1626
    %v1628 = vpop.xlane.xlu0 %1627
    %v1629 = vmul.f32 %v1628, 0.03125
    %v1630 = vadd.f32 %v1629, 1e-05
    %v1631 = vrsqrt.pop %v1630
    %v1632 = vmul.f32 %v1625, %v1631
    %v1634 = vlaneseq
    %v1635 = vshrl.u32 %v1634, 7
    %v1636 = vsub.s32 0, %v1635
    %v1637 = vrot.slane %v1618, %v1636
    %v1639 = vmul.f32 %v1632, %v1637
    %v1641 = vlaneseq
    %v1642 = vshrl.u32 %v1641, 7
    %v1643 = vsub.s32 0, %v1642
    %v1644 = vrot.slane %v1620, %v1643
    %v1646 = vadd.f32 %v1639, %v1644
    %v1647 = vmax.f32 %v1646, 0.0
    %v1648 = vpack.c.bf16 %v1647, %v1647
    %v1649 = vld [vmem:[#allocation10] sm:$0xf]
    %v1650 = vld [vmem:[#allocation10 + $0x4] sm:$0xf]
    %v1651 = vld [vmem:[#allocation10 + $0x8] sm:$0xf]
    %v1652 = vld [vmem:[#allocation10 + $0xc] sm:$0xf]
    %v1653 = vld [vmem:[#allocation10 + $0x10] sm:$0xf]
    %v1654 = vld [vmem:[#allocation10 + $0x14] sm:$0xf]
    %v1655 = vld [vmem:[#allocation10 + $0x18] sm:$0xf]
    %v1656 = vld [vmem:[#allocation10 + $0x1c] sm:$0xf]
    %v1657 = vld [vmem:[#allocation10 + $0x20] sm:$0xf]
    %v1658 = vld [vmem:[#allocation10 + $0x24] sm:$0xf]
    %v1659 = vld [vmem:[#allocation10 + $0x28] sm:$0xf]
    %v1660 = vld [vmem:[#allocation10 + $0x2c] sm:$0xf]
    %v1661 = vld [vmem:[#allocation10 + $0x30] sm:$0xf]
    %v1662 = vld [vmem:[#allocation10 + $0x34] sm:$0xf]
    %v1663 = vld [vmem:[#allocation10 + $0x38] sm:$0xf]
    %v1664 = vld [vmem:[#allocation10 + $0x3c] sm:$0xf]
    %v1665 = vld [vmem:[%s12] sm:$0x1]
    %v1667 = vlaneseq
    %v1668 = vshrl.u32 %v1667, 7
    %v1669 = vsub.s32 0, %v1668
    %v1670 = vrot.slane %v1665, %v1669
    %v1688 = vunpack.c.l.b16 %v1649
    %v1689 = vunpack.c.l.b16 %v1650
    %v1690 = vunpack.c.l.b16 %v1651
    %v1691 = vunpack.c.l.b16 %v1652
    %v1692 = vunpack.c.l.b16 %v1653
    %v1693 = vunpack.c.l.b16 %v1654
    %v1694 = vunpack.c.l.b16 %v1655
    %v1695 = vunpack.c.l.b16 %v1656
    %v1696 = vunpack.c.l.b16 %v1657
    %v1697 = vunpack.c.l.b16 %v1658
    %v1698 = vunpack.c.l.b16 %v1659
    %v1699 = vunpack.c.l.b16 %v1660
    %v1700 = vunpack.c.l.b16 %v1661
    %v1701 = vunpack.c.l.b16 %v1662
    %v1702 = vunpack.c.l.b16 %v1663
    %v1703 = vunpack.c.l.b16 %v1664
    %v1704 = vpack.c.b16 %v1689, %v1688
    %v1705 = vpack.c.b16 %v1691, %v1690
    %v1706 = vpack.c.b16 %v1693, %v1692
    %v1707 = vpack.c.b16 %v1695, %v1694
    %v1708 = vpack.c.b16 %v1697, %v1696
    %v1709 = vpack.c.b16 %v1699, %v1698
    %v1710 = vpack.c.b16 %v1701, %v1700
    %v1711 = vpack.c.b16 %v1703, %v1702
    %1720 = vmatprep.subr.bf16.mxu0 0
    %1721 = vmatpush1.bf16.msra.mxu0 %v1704
    %1722 = vmatprep.subr.bf16.mxu0 0
    %1723 = vmatpush1.bf16.msra.mxu0 %v1705
    %1724 = vmatprep.subr.bf16.mxu0 0
    %1725 = vmatpush1.bf16.msra.mxu0 %v1706
    %1726 = vmatprep.subr.bf16.mxu0 0
    %1727 = vmatpush1.bf16.msra.mxu0 %v1707
    %1728 = vmatprep.subr.bf16.mxu0 0
    %1729 = vmatpush1.bf16.msra.mxu0 %v1708
    %1730 = vmatprep.subr.bf16.mxu0 0
    %1731 = vmatpush1.bf16.msra.mxu0 %v1709
    %1732 = vmatprep.subr.bf16.mxu0 0
    %1733 = vmatpush1.bf16.msra.mxu0 %v1710
    %1734 = vmatprep.subr.bf16.mxu0 0
    %1735 = vmatpush1.bf16.msra.mxu0 %v1711
    %1736 = vmatprep.subr.bf16.mxu0 0
    %1737 = vmatpush1.bf16.msra.mxu0 0
    %1738 = vmatprep.subr.bf16.mxu0 0
    %1739 = vmatpush1.bf16.msra.mxu0 0
    %1740 = vmatprep.subr.bf16.mxu0 0
    %1741 = vmatpush1.bf16.msra.mxu0 0
    %1742 = vmatprep.subr.bf16.mxu0 0
    %1743 = vmatpush1.bf16.msra.mxu0 0
    %1744 = vmatprep.subr.bf16.mxu0 0
    %1745 = vmatpush1.bf16.msra.mxu0 0
    %1746 = vmatprep.subr.bf16.mxu0 0
    %1747 = vmatpush1.bf16.msra.mxu0 0
    %1748 = vmatprep.subr.bf16.mxu0 0
    %1749 = vmatpush1.bf16.msra.mxu0 0
    %1750 = vmatprep.subr.bf16.mxu0 0
    %1751 = vmatpush1.bf16.msra.mxu0 0
    %1752 = vmatprep.mubr.bf16.mxu0 0
    %1753 = vmatmul.mubr.bf16.gmra.mrb[0].mxu0 %v1648
    %v1754 = vpop.f32.mrb[0].mxu0
    %v1755 = vadd.f32 %v1670, %v1754
    %v1756 = vpop.f32.mrb[0].mxu0
    %v1757 = vpop.f32.mrb[0].mxu0
    %v1758 = vpop.f32.mrb[0].mxu0
    %1759 = vdwg.mxu0
    %1760 = vst [vmem:[#allocation11] sm:$0xff] %v1755
    // Predicated region
    $region74: #{tpu_custom_call.1} parent=1 // pred_check
      _
    $region75: #{tpu_custom_call.1} parent=1 // pred_check_branch
      %1762 = sbr.rel (0) target = $region77
    $region76: #{tpu_custom_call.1} parent=1 // pred_region
      %s1764 = ssub.s32 128, 128
      %1765 = vsyncadd [#allocation4], %s1764
      %s1767 = sshll.u32 [#allocation11], 4
      %s1768 = int_to_ptr.vmem [resolvable:$true] %s1767
      %1770 = dma.vmem_to_hbm [thread:$0]  %s1768, 128, %s13, [#allocation4]
    $region77: #{tpu_custom_call.1} parent=1 // pred_fallthru
      _
    // Predicated region
    $region78: #{tpu_custom_call.1} parent=1 // pred_check
      _
    $region79: #{tpu_custom_call.1} parent=1 // pred_check_branch
      %1772 = sbr.rel (0) target = $region81
    $region80: #{tpu_custom_call.1} parent=1 // pred_region
      %1773 = dma.done [#allocation4], 128
    $region81: #{tpu_custom_call.1} parent=1 // pred_fallthru
      _
    %1774 = vsyncpa [#allocation3], 1
    %1775 = vsyncpa [#allocation6], 1
    %1776 = vsyncpa [#allocation9], 1
    %1777 = vsyncpa [#allocation4], 1

</llo_original>
